<compile_context>
chip_gen: v7x
topology: tpu7x:2x2x1
jax: 0.10.0
libtpu: 0.0.40
codegen_flags: <defaults>
</compile_context>

<pallas_src>
import math
import functools

import jax
import jax.numpy as jnp
from jax.experimental import pallas as pl
from jax.experimental.pallas import tpu as pltpu


# ---------------------------------------------------------------------------
# Pallas kernel: full transformer block for a block of Bt batch elements.
# ---------------------------------------------------------------------------
def _block_kernel(x_ref,
                  ln1g_ref, ln1b_ref,
                  wqkv_ref, bqkv_ref,
                  wp_ref, bp_ref,
                  ln2g_ref, ln2b_ref,
                  w1_ref, b1_ref, w2_ref, b2_ref,
                  o_ref, *, n_head):
    xb = x_ref[...]                                  # (Bt, T, C) f32
    Bt, T, C = xb.shape
    hd = C // n_head
    scale = 1.0 / math.sqrt(hd)
    eps = 1e-5

    x2d = xb.reshape(Bt * T, C)                      # flatten rows -> fill MXU M dim

    def layernorm(v, g, b):
        mu = jnp.mean(v, axis=-1, keepdims=True)
        var = jnp.mean((v - mu) ** 2, axis=-1, keepdims=True)
        return (v - mu) * jax.lax.rsqrt(var + eps) * g + b

    # ---- attention branch: attn(ln1(x)) ----
    xln = layernorm(x2d, ln1g_ref[...], ln1b_ref[...])

    # Fused QKV projection: one (Bt*T, C) @ (C, 3C) bf16 matmul, f32 accumulate.
    qkv = jnp.dot(xln.astype(jnp.bfloat16), wqkv_ref[...],
                  preferred_element_type=jnp.float32) + bqkv_ref[...]   # (Bt*T, 3C)
    q = qkv[:, 0 * C:1 * C].reshape(Bt, T, C)
    k = qkv[:, 1 * C:2 * C].reshape(Bt, T, C)
    v = qkv[:, 2 * C:3 * C].reshape(Bt, T, C)

    # Causal mask as a finite additive bias, built in-kernel (no mask DMA, no -inf).
    row = jax.lax.broadcasted_iota(jnp.int32, (T, T), 0)
    col = jax.lax.broadcasted_iota(jnp.int32, (T, T), 1)
    bias = jnp.where(col <= row, 0.0, -1e30).astype(jnp.float32)        # (T, T)

    head_outs = []
    for h in range(n_head):                          # small static unroll over heads
        qh = q[:, :, h * hd:(h + 1) * hd].astype(jnp.bfloat16)          # (Bt, T, hd)
        kh = k[:, :, h * hd:(h + 1) * hd].astype(jnp.bfloat16)
        vh = v[:, :, h * hd:(h + 1) * hd].astype(jnp.bfloat16)
        s = jnp.einsum('bqd,bkd->bqk', qh, kh,
                       preferred_element_type=jnp.float32) * scale      # (Bt, T, T)
        s = s + bias[None, :, :]
        s = s - jnp.max(s, axis=-1, keepdims=True)
        p = jnp.exp(s)
        denom = jnp.sum(p, axis=-1, keepdims=True)
        p = p * pl.reciprocal(denom, approx=True)                       # EUP recip
        head_outs.append(jnp.einsum('bqk,bkd->bqd', p.astype(jnp.bfloat16), vh,
                                    preferred_element_type=jnp.float32))
    y = jnp.concatenate(head_outs, axis=-1)                             # (Bt, T, C)
    y2d = jnp.dot(y.reshape(Bt * T, C).astype(jnp.bfloat16), wp_ref[...],
                  preferred_element_type=jnp.float32) + bp_ref[...]

    x1 = x2d + y2d                                   # first residual (f32)

    # ---- MLP branch: mlp(ln2(x1)) ----
    x2ln = layernorm(x1, ln2g_ref[...], ln2b_ref[...])
    hmid = jnp.dot(x2ln.astype(jnp.bfloat16), w1_ref[...],
                   preferred_element_type=jnp.float32) + b1_ref[...]
    # exact GELU (torch nn.GELU default), kept in f32
    hmid = 0.5 * hmid * (1.0 + jax.lax.erf(hmid * (1.0 / math.sqrt(2.0))))
    out = x1 + jnp.dot(hmid.astype(jnp.bfloat16), w2_ref[...],
                       preferred_element_type=jnp.float32) + b2_ref[...]

    o_ref[...] = out.reshape(Bt, T, C)


# ---------------------------------------------------------------------------
# Wrapper
# ---------------------------------------------------------------------------
def _pick_block_batch(B, T, max_rows=512):
    """Largest divisor of B such that Bt*T stays within a modest VMEM row budget."""
    best = 1
    for bt in range(1, B + 1):
        if B % bt == 0 and bt * T <= max(max_rows, T):
            best = bt
    return best


def transformer_block(x, attn_mask, params, n_head):
    """x: (B, T, C) f32. attn_mask is accepted for API parity with the module but
    is assumed to be the standard causal tril (it is generated in-kernel)."""
    del attn_mask  # causal mask is built inside the kernel via iota
    B, T, C = x.shape
    H = 4 * C
    assert C % n_head == 0

    Bt = _pick_block_batch(B, T)
    grid = (B // Bt,)

    # Pack + cast weights host-side: fused QKV weight (C, 3C) and bf16 matmul weights.
    wqkv = jnp.concatenate([params["wq"], params["wk"], params["wv"]],
                           axis=1).astype(jnp.bfloat16)                  # (C, 3C)
    bqkv = jnp.concatenate([params["bq"], params["bk"], params["bv"]],
                           axis=1).astype(jnp.float32)                   # (1, 3C)
    wp = params["wp"].astype(jnp.bfloat16)
    w1 = params["w1"].astype(jnp.bfloat16)
    w2 = params["w2"].astype(jnp.bfloat16)

    operands = (x, params["ln1_g"], params["ln1_b"], wqkv, bqkv,
                wp, params["bp"], params["ln2_g"], params["ln2_b"],
                w1, params["b1"], w2, params["b2"])

    def full_spec(shape):
        nd = len(shape)
        return pl.BlockSpec(shape, lambda b, _nd=nd: (0,) * _nd)

    in_specs = [
        pl.BlockSpec((Bt, T, C), lambda b: (b, 0, 0)),  # x block
        full_spec((1, C)), full_spec((1, C)),           # ln1 gamma, beta
        full_spec((C, 3 * C)), full_spec((1, 3 * C)),   # fused Wqkv, bqkv
        full_spec((C, C)), full_spec((1, C)),           # Wproj, bproj
        full_spec((1, C)), full_spec((1, C)),           # ln2 gamma, beta
        full_spec((C, H)), full_spec((1, H)),           # W1, b1
        full_spec((H, C)), full_spec((1, C)),           # W2, b2
    ]

    # VMEM budget from the actual operand footprint (weights are grid-invariant so
    # Pallas keeps them resident; x/out blocks double-buffered) + activation slack.
    operand_bytes = sum(int(a.size) * a.dtype.itemsize for a in operands[1:])
    block_bytes = 4 * (Bt * T * C * 4)                       # x + out, double-buffered
    act_bytes = (Bt * T * (6 * C + H) + 2 * Bt * T * T) * 4  # qkv/y/x1/hmid + scores
    vmem_limit = min(64 * 1024 * 1024,
                     2 * operand_bytes + block_bytes + act_bytes + (8 << 20))

    kernel = functools.partial(_block_kernel, n_head=n_head)
    return pl.pallas_call(
        kernel,
        out_shape=jax.ShapeDtypeStruct((B, T, C), jnp.float32),
        grid_spec=pltpu.PrefetchScalarGridSpec(
            num_scalar_prefetch=0,
            grid=grid,
            in_specs=in_specs,
            out_specs=pl.BlockSpec((Bt, T, C), lambda b: (b, 0, 0)),
        ),
        compiler_params=pltpu.CompilerParams(
            dimension_semantics=("parallel",),   # batch blocks are independent
            vmem_limit_bytes=int(vmem_limit),
        ),
    )(*operands)


# ---------------------------------------------------------------------------
# Pure-JAX f32 reference (same math as the PyTorch module, eval mode).
# ---------------------------------------------------------------------------
def reference_block(x, mask, p, n_head):
    def ln(v, g, b):
        mu = jnp.mean(v, -1, keepdims=True)
        var = jnp.mean((v - mu) ** 2, -1, keepdims=True)
        return (v - mu) / jnp.sqrt(var + 1e-5) * g + b

    B, T, C = x.shape
    hd = C // n_head
    xln = ln(x, p["ln1_g"], p["ln1_b"])
    q = xln @ p["wq"] + p["bq"]
    k = xln @ p["wk"] + p["bk"]
    v = xln @ p["wv"] + p["bv"]
    q = q.reshape(B, T, n_head, hd).transpose(0, 2, 1, 3)
    k = k.reshape(B, T, n_head, hd).transpose(0, 2, 1, 3)
    v = v.reshape(B, T, n_head, hd).transpose(0, 2, 1, 3)
    att = jnp.einsum("bhqd,bhkd->bhqk", q, k) / math.sqrt(hd)
    att = jnp.where(mask[None, None] == 0.0, -jnp.inf, att)
    att = jax.nn.softmax(att, axis=-1)
    y = jnp.einsum("bhqk,bhkd->bhqd", att, v).transpose(0, 2, 1, 3).reshape(B, T, C)
    y = y @ p["wp"] + p["bp"]
    x1 = x + y
    h = ln(x1, p["ln2_g"], p["ln2_b"]) @ p["w1"] + p["b1"]
    h = 0.5 * h * (1.0 + jax.lax.erf(h / math.sqrt(2.0)))
    return x1 + h @ p["w2"] + p["b2"]


# ---------------------------------------------------------------------------
if __name__ == "__main__":
    B, T, C, n_head = 2, 8, 32, 4
    H = 4 * C

    key = jax.random.PRNGKey(0)
    keys = jax.random.split(key, 16)

    def init_w(k, shape, scale=0.02):
        return (scale * jax.random.normal(k, shape)).astype(jnp.float32)

    # weights stored so that y = x @ W + b  (transpose of torch Linear.weight)
    params = {
        "ln1_g": jnp.ones((1, C), jnp.float32),
        "ln1_b": jnp.zeros((1, C), jnp.float32),
        "wq": init_w(keys[0], (C, C)), "bq": init_w(keys[1], (1, C)),
        "wk": init_w(keys[2], (C, C)), "bk": init_w(keys[3], (1, C)),
        "wv": init_w(keys[4], (C, C)), "bv": init_w(keys[5], (1, C)),
        "wp": init_w(keys[6], (C, C)), "bp": init_w(keys[7], (1, C)),
        "ln2_g": jnp.ones((1, C), jnp.float32),
        "ln2_b": jnp.zeros((1, C), jnp.float32),
        "w1": init_w(keys[8], (C, H)), "b1": init_w(keys[9], (1, H)),
        "w2": init_w(keys[10], (H, C)), "b2": init_w(keys[11], (1, C)),
    }

    x = jax.random.normal(keys[12], (B, T, C), jnp.float32)
    # causal mask == attn_mask[:, :, :T, :T] of the registered tril buffer
    attn_mask = jnp.tril(jnp.ones((T, T), jnp.float32))

    out = transformer_block(x, attn_mask, params, n_head)
    out = jax.block_until_ready(out)

    ref = reference_block(x, attn_mask, params, n_head)
    assert out.shape == (B, T, C)
    # bf16 matmul operands + approx reciprocal => compare against f32 ref loosely
    assert jnp.allclose(out, ref, atol=1e-2, rtol=1e-2), (
        f"max abs err {jnp.max(jnp.abs(out - ref))}")

    print("KERNEL_OK")
</pallas_src>

<mosaic_0001>
module attributes {stable_mosaic.version = 11 : i64} {
  func.func @_block_kernel(%arg0: i32, %arg1: memref<2x8x32xf32, #tpu.memory_space<vmem>>, %arg2: memref<1x32xf32, #tpu.memory_space<vmem>>, %arg3: memref<1x32xf32, #tpu.memory_space<vmem>>, %arg4: memref<32x96xbf16, #tpu.memory_space<vmem>>, %arg5: memref<1x96xf32, #tpu.memory_space<vmem>>, %arg6: memref<32x32xbf16, #tpu.memory_space<vmem>>, %arg7: memref<1x32xf32, #tpu.memory_space<vmem>>, %arg8: memref<1x32xf32, #tpu.memory_space<vmem>>, %arg9: memref<1x32xf32, #tpu.memory_space<vmem>>, %arg10: memref<32x128xbf16, #tpu.memory_space<vmem>>, %arg11: memref<1x128xf32, #tpu.memory_space<vmem>>, %arg12: memref<128x32xbf16, #tpu.memory_space<vmem>>, %arg13: memref<1x32xf32, #tpu.memory_space<vmem>>, %arg14: memref<2x8x32xf32, #tpu.memory_space<vmem>>) attributes {dimension_semantics = [#tpu.dimension_semantics<parallel>], iteration_bounds = array<i64: 1>, scalar_prefetch = 0 : i64, scratch_operands = 0 : i64, tpu.core_type = #tpu.core_type<tc>, window_params = [{transform_indices = @transform_0, window_bounds = array<i64: 2, 8, 32>}, {pipeline_mode = #tpu.pipeline_mode<synchronous>, transform_indices = @transform_1, window_bounds = array<i64: 1, 32>}, {pipeline_mode = #tpu.pipeline_mode<synchronous>, transform_indices = @transform_2, window_bounds = array<i64: 1, 32>}, {pipeline_mode = #tpu.pipeline_mode<synchronous>, transform_indices = @transform_3, window_bounds = array<i64: 32, 96>}, {pipeline_mode = #tpu.pipeline_mode<synchronous>, transform_indices = @transform_4, window_bounds = array<i64: 1, 96>}, {pipeline_mode = #tpu.pipeline_mode<synchronous>, transform_indices = @transform_5, window_bounds = array<i64: 32, 32>}, {pipeline_mode = #tpu.pipeline_mode<synchronous>, transform_indices = @transform_6, window_bounds = array<i64: 1, 32>}, {pipeline_mode = #tpu.pipeline_mode<synchronous>, transform_indices = @transform_7, window_bounds = array<i64: 1, 32>}, {pipeline_mode = #tpu.pipeline_mode<synchronous>, transform_indices = @transform_8, window_bounds = array<i64: 1, 32>}, {pipeline_mode = #tpu.pipeline_mode<synchronous>, transform_indices = @transform_9, window_bounds = array<i64: 32, 128>}, {pipeline_mode = #tpu.pipeline_mode<synchronous>, transform_indices = @transform_10, window_bounds = array<i64: 1, 128>}, {pipeline_mode = #tpu.pipeline_mode<synchronous>, transform_indices = @transform_11, window_bounds = array<i64: 128, 32>}, {pipeline_mode = #tpu.pipeline_mode<synchronous>, transform_indices = @transform_12, window_bounds = array<i64: 1, 32>}, {transform_indices = @transform_13, window_bounds = array<i64: 2, 8, 32>}]} {
    %c0 = arith.constant 0 : index
    %c0_0 = arith.constant 0 : index
    %c0_1 = arith.constant 0 : index
    %0 = vector.load %arg1[%c0, %c0_0, %c0_1] : memref<2x8x32xf32, #tpu.memory_space<vmem>>, vector<2x8x32xf32>
    %1 = vector.shape_cast %0 : vector<2x8x32xf32> to vector<16x32xf32>
    %c0_2 = arith.constant 0 : index
    %c0_3 = arith.constant 0 : index
    %2 = vector.load %arg2[%c0_2, %c0_3] : memref<1x32xf32, #tpu.memory_space<vmem>>, vector<1x32xf32>
    %c0_4 = arith.constant 0 : index
    %c0_5 = arith.constant 0 : index
    %3 = vector.load %arg3[%c0_4, %c0_5] : memref<1x32xf32, #tpu.memory_space<vmem>>, vector<1x32xf32>
    %cst = arith.constant dense<0.000000e+00> : vector<16xf32>
    %4 = vector.multi_reduction <add>, %1, %cst [1] : vector<16x32xf32> to vector<16xf32>
    %5 = vector.shape_cast %4 : vector<16xf32> to vector<16x1xf32>
    %cst_6 = arith.constant 3.200000e+01 : f32
    %6 = vector.broadcast %cst_6 : f32 to vector<16x1xf32>
    %7 = arith.divf %5, %6 : vector<16x1xf32>
    %8 = vector.broadcast %7 : vector<16x1xf32> to vector<16x32xf32>
    %9 = arith.subf %1, %8 : vector<16x32xf32>
    %10 = arith.mulf %9, %9 : vector<16x32xf32>
    %cst_7 = arith.constant dense<0.000000e+00> : vector<16xf32>
    %11 = vector.multi_reduction <add>, %10, %cst_7 [1] : vector<16x32xf32> to vector<16xf32>
    %12 = vector.shape_cast %11 : vector<16xf32> to vector<16x1xf32>
    %cst_8 = arith.constant 3.200000e+01 : f32
    %13 = vector.broadcast %cst_8 : f32 to vector<16x1xf32>
    %14 = arith.divf %12, %13 : vector<16x1xf32>
    %15 = vector.broadcast %7 : vector<16x1xf32> to vector<16x32xf32>
    %16 = arith.subf %1, %15 : vector<16x32xf32>
    %cst_9 = arith.constant 9.99999974E-6 : f32
    %17 = vector.broadcast %cst_9 : f32 to vector<16x1xf32>
    %18 = arith.addf %14, %17 : vector<16x1xf32>
    %19 = math.rsqrt %18 : vector<16x1xf32>
    %20 = vector.broadcast %19 : vector<16x1xf32> to vector<16x32xf32>
    %21 = arith.mulf %16, %20 : vector<16x32xf32>
    %22 = vector.broadcast %2 : vector<1x32xf32> to vector<16x32xf32>
    %23 = arith.mulf %21, %22 : vector<16x32xf32>
    %24 = vector.broadcast %3 : vector<1x32xf32> to vector<16x32xf32>
    %25 = arith.addf %23, %24 : vector<16x32xf32>
    %26 = arith.truncf %25 : vector<16x32xf32> to vector<16x32xbf16>
    %c0_10 = arith.constant 0 : index
    %c0_11 = arith.constant 0 : index
    %27 = vector.load %arg4[%c0_10, %c0_11] : memref<32x96xbf16, #tpu.memory_space<vmem>>, vector<32x96xbf16>
    %cst_12 = arith.constant dense<0.000000e+00> : vector<16x96xf32>
    %28 = tpu.matmul %26, %27, %cst_12 {dimension_numbers = #tpu.dot_dimension_numbers<[1], [0], [0], [1], [0, 0, 1, 1], [], []>} : vector<16x32xbf16>, vector<32x96xbf16>, vector<16x96xf32> -> vector<16x96xf32>
    %c0_13 = arith.constant 0 : index
    %c0_14 = arith.constant 0 : index
    %29 = vector.load %arg5[%c0_13, %c0_14] : memref<1x96xf32, #tpu.memory_space<vmem>>, vector<1x96xf32>
    %30 = vector.broadcast %29 : vector<1x96xf32> to vector<16x96xf32>
    %31 = arith.addf %28, %30 : vector<16x96xf32>
    %32 = vector.extract_strided_slice %31 {offsets = [0, 0], sizes = [16, 32], strides = [1, 1]} : vector<16x96xf32> to vector<16x32xf32>
    %33 = vector.shape_cast %32 : vector<16x32xf32> to vector<2x8x32xf32>
    %34 = vector.extract_strided_slice %31 {offsets = [0, 32], sizes = [16, 32], strides = [1, 1]} : vector<16x96xf32> to vector<16x32xf32>
    %35 = vector.shape_cast %34 : vector<16x32xf32> to vector<2x8x32xf32>
    %36 = vector.extract_strided_slice %31 {offsets = [0, 64], sizes = [16, 32], strides = [1, 1]} : vector<16x96xf32> to vector<16x32xf32>
    %37 = vector.shape_cast %36 : vector<16x32xf32> to vector<2x8x32xf32>
    %38 = tpu.iota {dimensions = array<i32: 0>} : vector<8x8xi32>
    %39 = tpu.iota {dimensions = array<i32: 1>} : vector<8x8xi32>
    %40 = arith.cmpi sle, %39, %38 : vector<8x8xi32>
    %cst_15 = arith.constant 0.000000e+00 : f32
    %cst_16 = arith.constant -1.000000e+30 : f32
    %41 = vector.broadcast %cst_15 : f32 to vector<8x8xf32>
    %42 = vector.broadcast %cst_16 : f32 to vector<8x8xf32>
    %43 = arith.select %40, %41, %42 : vector<8x8xi1>, vector<8x8xf32>
    %44 = vector.extract_strided_slice %33 {offsets = [0, 0, 0], sizes = [2, 8, 8], strides = [1, 1, 1]} : vector<2x8x32xf32> to vector<2x8x8xf32>
    %45 = arith.truncf %44 : vector<2x8x8xf32> to vector<2x8x8xbf16>
    %46 = vector.extract_strided_slice %35 {offsets = [0, 0, 0], sizes = [2, 8, 8], strides = [1, 1, 1]} : vector<2x8x32xf32> to vector<2x8x8xf32>
    %47 = arith.truncf %46 : vector<2x8x8xf32> to vector<2x8x8xbf16>
    %48 = vector.extract_strided_slice %37 {offsets = [0, 0, 0], sizes = [2, 8, 8], strides = [1, 1, 1]} : vector<2x8x32xf32> to vector<2x8x8xf32>
    %49 = arith.truncf %48 : vector<2x8x8xf32> to vector<2x8x8xbf16>
    "tpu.trace_start"() <{level = 10 : i32, message = "bqd,bkd->bqk"}> : () -> ()
    %cst_17 = arith.constant dense<0.000000e+00> : vector<2x8x8xf32>
    %50 = tpu.matmul %45, %47, %cst_17 {dimension_numbers = #tpu.dot_dimension_numbers<[2], [2], [1], [1], [0, 0, 0, 1, 1, 1], [0], [0]>} : vector<2x8x8xbf16>, vector<2x8x8xbf16>, vector<2x8x8xf32> -> vector<2x8x8xf32>
    "tpu.trace_stop"() : () -> ()
    %cst_18 = arith.constant 0.353553385 : f32
    %51 = vector.broadcast %cst_18 : f32 to vector<2x8x8xf32>
    %52 = arith.mulf %50, %51 : vector<2x8x8xf32>
    %53 = vector.shape_cast %43 : vector<8x8xf32> to vector<1x8x8xf32>
    %54 = vector.broadcast %53 : vector<1x8x8xf32> to vector<2x8x8xf32>
    %55 = arith.addf %52, %54 : vector<2x8x8xf32>
    %cst_19 = arith.constant dense<0xFF800000> : vector<2x8xf32>
    %56 = vector.multi_reduction <maximumf>, %55, %cst_19 [2] : vector<2x8x8xf32> to vector<2x8xf32>
    %57 = vector.shape_cast %56 : vector<2x8xf32> to vector<2x8x1xf32>
    %58 = vector.broadcast %57 : vector<2x8x1xf32> to vector<2x8x8xf32>
    %59 = arith.subf %55, %58 : vector<2x8x8xf32>
    %60 = math.exp %59 : vector<2x8x8xf32>
    %cst_20 = arith.constant dense<0.000000e+00> : vector<2x8xf32>
    %61 = vector.multi_reduction <add>, %60, %cst_20 [2] : vector<2x8x8xf32> to vector<2x8xf32>
    %62 = vector.shape_cast %61 : vector<2x8xf32> to vector<2x8x1xf32>
    %63 = tpu.reciprocal %62 {approx = true} : vector<2x8x1xf32> -> vector<2x8x1xf32>
    %64 = vector.broadcast %63 : vector<2x8x1xf32> to vector<2x8x8xf32>
    %65 = arith.mulf %60, %64 : vector<2x8x8xf32>
    %66 = arith.truncf %65 : vector<2x8x8xf32> to vector<2x8x8xbf16>
    "tpu.trace_start"() <{level = 10 : i32, message = "bqk,bkd->bqd"}> : () -> ()
    %cst_21 = arith.constant dense<0.000000e+00> : vector<2x8x8xf32>
    %67 = tpu.matmul %66, %49, %cst_21 {dimension_numbers = #tpu.dot_dimension_numbers<[2], [1], [1], [2], [0, 0, 0, 1, 1, 2], [0], [0]>} : vector<2x8x8xbf16>, vector<2x8x8xbf16>, vector<2x8x8xf32> -> vector<2x8x8xf32>
    "tpu.trace_stop"() : () -> ()
    %68 = vector.extract_strided_slice %33 {offsets = [0, 0, 8], sizes = [2, 8, 8], strides = [1, 1, 1]} : vector<2x8x32xf32> to vector<2x8x8xf32>
    %69 = arith.truncf %68 : vector<2x8x8xf32> to vector<2x8x8xbf16>
    %70 = vector.extract_strided_slice %35 {offsets = [0, 0, 8], sizes = [2, 8, 8], strides = [1, 1, 1]} : vector<2x8x32xf32> to vector<2x8x8xf32>
    %71 = arith.truncf %70 : vector<2x8x8xf32> to vector<2x8x8xbf16>
    %72 = vector.extract_strided_slice %37 {offsets = [0, 0, 8], sizes = [2, 8, 8], strides = [1, 1, 1]} : vector<2x8x32xf32> to vector<2x8x8xf32>
    %73 = arith.truncf %72 : vector<2x8x8xf32> to vector<2x8x8xbf16>
    "tpu.trace_start"() <{level = 10 : i32, message = "bqd,bkd->bqk"}> : () -> ()
    %cst_22 = arith.constant dense<0.000000e+00> : vector<2x8x8xf32>
    %74 = tpu.matmul %69, %71, %cst_22 {dimension_numbers = #tpu.dot_dimension_numbers<[2], [2], [1], [1], [0, 0, 0, 1, 1, 1], [0], [0]>} : vector<2x8x8xbf16>, vector<2x8x8xbf16>, vector<2x8x8xf32> -> vector<2x8x8xf32>
    "tpu.trace_stop"() : () -> ()
    %cst_23 = arith.constant 0.353553385 : f32
    %75 = vector.broadcast %cst_23 : f32 to vector<2x8x8xf32>
    %76 = arith.mulf %74, %75 : vector<2x8x8xf32>
    %77 = vector.shape_cast %43 : vector<8x8xf32> to vector<1x8x8xf32>
    %78 = vector.broadcast %77 : vector<1x8x8xf32> to vector<2x8x8xf32>
    %79 = arith.addf %76, %78 : vector<2x8x8xf32>
    %cst_24 = arith.constant dense<0xFF800000> : vector<2x8xf32>
    %80 = vector.multi_reduction <maximumf>, %79, %cst_24 [2] : vector<2x8x8xf32> to vector<2x8xf32>
    %81 = vector.shape_cast %80 : vector<2x8xf32> to vector<2x8x1xf32>
    %82 = vector.broadcast %81 : vector<2x8x1xf32> to vector<2x8x8xf32>
    %83 = arith.subf %79, %82 : vector<2x8x8xf32>
    %84 = math.exp %83 : vector<2x8x8xf32>
    %cst_25 = arith.constant dense<0.000000e+00> : vector<2x8xf32>
    %85 = vector.multi_reduction <add>, %84, %cst_25 [2] : vector<2x8x8xf32> to vector<2x8xf32>
    %86 = vector.shape_cast %85 : vector<2x8xf32> to vector<2x8x1xf32>
    %87 = tpu.reciprocal %86 {approx = true} : vector<2x8x1xf32> -> vector<2x8x1xf32>
    %88 = vector.broadcast %87 : vector<2x8x1xf32> to vector<2x8x8xf32>
    %89 = arith.mulf %84, %88 : vector<2x8x8xf32>
    %90 = arith.truncf %89 : vector<2x8x8xf32> to vector<2x8x8xbf16>
    "tpu.trace_start"() <{level = 10 : i32, message = "bqk,bkd->bqd"}> : () -> ()
    %cst_26 = arith.constant dense<0.000000e+00> : vector<2x8x8xf32>
    %91 = tpu.matmul %90, %73, %cst_26 {dimension_numbers = #tpu.dot_dimension_numbers<[2], [1], [1], [2], [0, 0, 0, 1, 1, 2], [0], [0]>} : vector<2x8x8xbf16>, vector<2x8x8xbf16>, vector<2x8x8xf32> -> vector<2x8x8xf32>
    "tpu.trace_stop"() : () -> ()
    %92 = vector.extract_strided_slice %33 {offsets = [0, 0, 16], sizes = [2, 8, 8], strides = [1, 1, 1]} : vector<2x8x32xf32> to vector<2x8x8xf32>
    %93 = arith.truncf %92 : vector<2x8x8xf32> to vector<2x8x8xbf16>
    %94 = vector.extract_strided_slice %35 {offsets = [0, 0, 16], sizes = [2, 8, 8], strides = [1, 1, 1]} : vector<2x8x32xf32> to vector<2x8x8xf32>
    %95 = arith.truncf %94 : vector<2x8x8xf32> to vector<2x8x8xbf16>
    %96 = vector.extract_strided_slice %37 {offsets = [0, 0, 16], sizes = [2, 8, 8], strides = [1, 1, 1]} : vector<2x8x32xf32> to vector<2x8x8xf32>
    %97 = arith.truncf %96 : vector<2x8x8xf32> to vector<2x8x8xbf16>
    "tpu.trace_start"() <{level = 10 : i32, message = "bqd,bkd->bqk"}> : () -> ()
    %cst_27 = arith.constant dense<0.000000e+00> : vector<2x8x8xf32>
    %98 = tpu.matmul %93, %95, %cst_27 {dimension_numbers = #tpu.dot_dimension_numbers<[2], [2], [1], [1], [0, 0, 0, 1, 1, 1], [0], [0]>} : vector<2x8x8xbf16>, vector<2x8x8xbf16>, vector<2x8x8xf32> -> vector<2x8x8xf32>
    "tpu.trace_stop"() : () -> ()
    %cst_28 = arith.constant 0.353553385 : f32
    %99 = vector.broadcast %cst_28 : f32 to vector<2x8x8xf32>
    %100 = arith.mulf %98, %99 : vector<2x8x8xf32>
    %101 = vector.shape_cast %43 : vector<8x8xf32> to vector<1x8x8xf32>
    %102 = vector.broadcast %101 : vector<1x8x8xf32> to vector<2x8x8xf32>
    %103 = arith.addf %100, %102 : vector<2x8x8xf32>
    %cst_29 = arith.constant dense<0xFF800000> : vector<2x8xf32>
    %104 = vector.multi_reduction <maximumf>, %103, %cst_29 [2] : vector<2x8x8xf32> to vector<2x8xf32>
    %105 = vector.shape_cast %104 : vector<2x8xf32> to vector<2x8x1xf32>
    %106 = vector.broadcast %105 : vector<2x8x1xf32> to vector<2x8x8xf32>
    %107 = arith.subf %103, %106 : vector<2x8x8xf32>
    %108 = math.exp %107 : vector<2x8x8xf32>
    %cst_30 = arith.constant dense<0.000000e+00> : vector<2x8xf32>
    %109 = vector.multi_reduction <add>, %108, %cst_30 [2] : vector<2x8x8xf32> to vector<2x8xf32>
    %110 = vector.shape_cast %109 : vector<2x8xf32> to vector<2x8x1xf32>
    %111 = tpu.reciprocal %110 {approx = true} : vector<2x8x1xf32> -> vector<2x8x1xf32>
    %112 = vector.broadcast %111 : vector<2x8x1xf32> to vector<2x8x8xf32>
    %113 = arith.mulf %108, %112 : vector<2x8x8xf32>
    %114 = arith.truncf %113 : vector<2x8x8xf32> to vector<2x8x8xbf16>
    "tpu.trace_start"() <{level = 10 : i32, message = "bqk,bkd->bqd"}> : () -> ()
    %cst_31 = arith.constant dense<0.000000e+00> : vector<2x8x8xf32>
    %115 = tpu.matmul %114, %97, %cst_31 {dimension_numbers = #tpu.dot_dimension_numbers<[2], [1], [1], [2], [0, 0, 0, 1, 1, 2], [0], [0]>} : vector<2x8x8xbf16>, vector<2x8x8xbf16>, vector<2x8x8xf32> -> vector<2x8x8xf32>
    "tpu.trace_stop"() : () -> ()
    %116 = vector.extract_strided_slice %33 {offsets = [0, 0, 24], sizes = [2, 8, 8], strides = [1, 1, 1]} : vector<2x8x32xf32> to vector<2x8x8xf32>
    %117 = arith.truncf %116 : vector<2x8x8xf32> to vector<2x8x8xbf16>
    %118 = vector.extract_strided_slice %35 {offsets = [0, 0, 24], sizes = [2, 8, 8], strides = [1, 1, 1]} : vector<2x8x32xf32> to vector<2x8x8xf32>
    %119 = arith.truncf %118 : vector<2x8x8xf32> to vector<2x8x8xbf16>
    %120 = vector.extract_strided_slice %37 {offsets = [0, 0, 24], sizes = [2, 8, 8], strides = [1, 1, 1]} : vector<2x8x32xf32> to vector<2x8x8xf32>
    %121 = arith.truncf %120 : vector<2x8x8xf32> to vector<2x8x8xbf16>
    "tpu.trace_start"() <{level = 10 : i32, message = "bqd,bkd->bqk"}> : () -> ()
    %cst_32 = arith.constant dense<0.000000e+00> : vector<2x8x8xf32>
    %122 = tpu.matmul %117, %119, %cst_32 {dimension_numbers = #tpu.dot_dimension_numbers<[2], [2], [1], [1], [0, 0, 0, 1, 1, 1], [0], [0]>} : vector<2x8x8xbf16>, vector<2x8x8xbf16>, vector<2x8x8xf32> -> vector<2x8x8xf32>
    "tpu.trace_stop"() : () -> ()
    %cst_33 = arith.constant 0.353553385 : f32
    %123 = vector.broadcast %cst_33 : f32 to vector<2x8x8xf32>
    %124 = arith.mulf %122, %123 : vector<2x8x8xf32>
    %125 = vector.shape_cast %43 : vector<8x8xf32> to vector<1x8x8xf32>
    %126 = vector.broadcast %125 : vector<1x8x8xf32> to vector<2x8x8xf32>
    %127 = arith.addf %124, %126 : vector<2x8x8xf32>
    %cst_34 = arith.constant dense<0xFF800000> : vector<2x8xf32>
    %128 = vector.multi_reduction <maximumf>, %127, %cst_34 [2] : vector<2x8x8xf32> to vector<2x8xf32>
    %129 = vector.shape_cast %128 : vector<2x8xf32> to vector<2x8x1xf32>
    %130 = vector.broadcast %129 : vector<2x8x1xf32> to vector<2x8x8xf32>
    %131 = arith.subf %127, %130 : vector<2x8x8xf32>
    %132 = math.exp %131 : vector<2x8x8xf32>
    %cst_35 = arith.constant dense<0.000000e+00> : vector<2x8xf32>
    %133 = vector.multi_reduction <add>, %132, %cst_35 [2] : vector<2x8x8xf32> to vector<2x8xf32>
    %134 = vector.shape_cast %133 : vector<2x8xf32> to vector<2x8x1xf32>
    %135 = tpu.reciprocal %134 {approx = true} : vector<2x8x1xf32> -> vector<2x8x1xf32>
    %136 = vector.broadcast %135 : vector<2x8x1xf32> to vector<2x8x8xf32>
    %137 = arith.mulf %132, %136 : vector<2x8x8xf32>
    %138 = arith.truncf %137 : vector<2x8x8xf32> to vector<2x8x8xbf16>
    "tpu.trace_start"() <{level = 10 : i32, message = "bqk,bkd->bqd"}> : () -> ()
    %cst_36 = arith.constant dense<0.000000e+00> : vector<2x8x8xf32>
    %139 = tpu.matmul %138, %121, %cst_36 {dimension_numbers = #tpu.dot_dimension_numbers<[2], [1], [1], [2], [0, 0, 0, 1, 1, 2], [0], [0]>} : vector<2x8x8xbf16>, vector<2x8x8xbf16>, vector<2x8x8xf32> -> vector<2x8x8xf32>
    "tpu.trace_stop"() : () -> ()
    %140 = tpu.concatenate %67, %91, %115, %139 in 2 : vector<2x8x8xf32>, vector<2x8x8xf32>, vector<2x8x8xf32>, vector<2x8x8xf32> -> vector<2x8x32xf32>
    %141 = vector.shape_cast %140 : vector<2x8x32xf32> to vector<16x32xf32>
    %142 = arith.truncf %141 : vector<16x32xf32> to vector<16x32xbf16>
    %c0_37 = arith.constant 0 : index
    %c0_38 = arith.constant 0 : index
    %143 = vector.load %arg6[%c0_37, %c0_38] : memref<32x32xbf16, #tpu.memory_space<vmem>>, vector<32x32xbf16>
    %cst_39 = arith.constant dense<0.000000e+00> : vector<16x32xf32>
    %144 = tpu.matmul %142, %143, %cst_39 {dimension_numbers = #tpu.dot_dimension_numbers<[1], [0], [0], [1], [0, 0, 1, 1], [], []>} : vector<16x32xbf16>, vector<32x32xbf16>, vector<16x32xf32> -> vector<16x32xf32>
    %c0_40 = arith.constant 0 : index
    %c0_41 = arith.constant 0 : index
    %145 = vector.load %arg7[%c0_40, %c0_41] : memref<1x32xf32, #tpu.memory_space<vmem>>, vector<1x32xf32>
    %146 = vector.broadcast %145 : vector<1x32xf32> to vector<16x32xf32>
    %147 = arith.addf %144, %146 : vector<16x32xf32>
    %148 = arith.addf %1, %147 : vector<16x32xf32>
    %c0_42 = arith.constant 0 : index
    %c0_43 = arith.constant 0 : index
    %149 = vector.load %arg8[%c0_42, %c0_43] : memref<1x32xf32, #tpu.memory_space<vmem>>, vector<1x32xf32>
    %c0_44 = arith.constant 0 : index
    %c0_45 = arith.constant 0 : index
    %150 = vector.load %arg9[%c0_44, %c0_45] : memref<1x32xf32, #tpu.memory_space<vmem>>, vector<1x32xf32>
    %cst_46 = arith.constant dense<0.000000e+00> : vector<16xf32>
    %151 = vector.multi_reduction <add>, %148, %cst_46 [1] : vector<16x32xf32> to vector<16xf32>
    %152 = vector.shape_cast %151 : vector<16xf32> to vector<16x1xf32>
    %cst_47 = arith.constant 3.200000e+01 : f32
    %153 = vector.broadcast %cst_47 : f32 to vector<16x1xf32>
    %154 = arith.divf %152, %153 : vector<16x1xf32>
    %155 = vector.broadcast %154 : vector<16x1xf32> to vector<16x32xf32>
    %156 = arith.subf %148, %155 : vector<16x32xf32>
    %157 = arith.mulf %156, %156 : vector<16x32xf32>
    %cst_48 = arith.constant dense<0.000000e+00> : vector<16xf32>
    %158 = vector.multi_reduction <add>, %157, %cst_48 [1] : vector<16x32xf32> to vector<16xf32>
    %159 = vector.shape_cast %158 : vector<16xf32> to vector<16x1xf32>
    %cst_49 = arith.constant 3.200000e+01 : f32
    %160 = vector.broadcast %cst_49 : f32 to vector<16x1xf32>
    %161 = arith.divf %159, %160 : vector<16x1xf32>
    %162 = vector.broadcast %154 : vector<16x1xf32> to vector<16x32xf32>
    %163 = arith.subf %148, %162 : vector<16x32xf32>
    %cst_50 = arith.constant 9.99999974E-6 : f32
    %164 = vector.broadcast %cst_50 : f32 to vector<16x1xf32>
    %165 = arith.addf %161, %164 : vector<16x1xf32>
    %166 = math.rsqrt %165 : vector<16x1xf32>
    %167 = vector.broadcast %166 : vector<16x1xf32> to vector<16x32xf32>
    %168 = arith.mulf %163, %167 : vector<16x32xf32>
    %169 = vector.broadcast %149 : vector<1x32xf32> to vector<16x32xf32>
    %170 = arith.mulf %168, %169 : vector<16x32xf32>
    %171 = vector.broadcast %150 : vector<1x32xf32> to vector<16x32xf32>
    %172 = arith.addf %170, %171 : vector<16x32xf32>
    %173 = arith.truncf %172 : vector<16x32xf32> to vector<16x32xbf16>
    %c0_51 = arith.constant 0 : index
    %c0_52 = arith.constant 0 : index
    %174 = vector.load %arg10[%c0_51, %c0_52] : memref<32x128xbf16, #tpu.memory_space<vmem>>, vector<32x128xbf16>
    %cst_53 = arith.constant dense<0.000000e+00> : vector<16x128xf32>
    %175 = tpu.matmul %173, %174, %cst_53 {dimension_numbers = #tpu.dot_dimension_numbers<[1], [0], [0], [1], [0, 0, 1, 1], [], []>} : vector<16x32xbf16>, vector<32x128xbf16>, vector<16x128xf32> -> vector<16x128xf32>
    %c0_54 = arith.constant 0 : index
    %c0_55 = arith.constant 0 : index
    %176 = vector.load %arg11[%c0_54, %c0_55] : memref<1x128xf32, #tpu.memory_space<vmem>>, vector<1x128xf32>
    %177 = vector.broadcast %176 : vector<1x128xf32> to vector<16x128xf32>
    %178 = arith.addf %175, %177 : vector<16x128xf32>
    %cst_56 = arith.constant 5.000000e-01 : f32
    %179 = vector.broadcast %cst_56 : f32 to vector<16x128xf32>
    %180 = arith.mulf %179, %178 : vector<16x128xf32>
    %cst_57 = arith.constant 0.707106769 : f32
    %181 = vector.broadcast %cst_57 : f32 to vector<16x128xf32>
    %182 = arith.mulf %178, %181 : vector<16x128xf32>
    %183 = math.erf %182 : vector<16x128xf32>
    %cst_58 = arith.constant 1.000000e+00 : f32
    %184 = vector.broadcast %cst_58 : f32 to vector<16x128xf32>
    %185 = arith.addf %184, %183 : vector<16x128xf32>
    %186 = arith.mulf %180, %185 : vector<16x128xf32>
    %187 = arith.truncf %186 : vector<16x128xf32> to vector<16x128xbf16>
    %c0_59 = arith.constant 0 : index
    %c0_60 = arith.constant 0 : index
    %188 = vector.load %arg12[%c0_59, %c0_60] : memref<128x32xbf16, #tpu.memory_space<vmem>>, vector<128x32xbf16>
    %cst_61 = arith.constant dense<0.000000e+00> : vector<16x32xf32>
    %189 = tpu.matmul %187, %188, %cst_61 {dimension_numbers = #tpu.dot_dimension_numbers<[1], [0], [0], [1], [0, 0, 1, 1], [], []>} : vector<16x128xbf16>, vector<128x32xbf16>, vector<16x32xf32> -> vector<16x32xf32>
    %190 = arith.addf %148, %189 : vector<16x32xf32>
    %c0_62 = arith.constant 0 : index
    %c0_63 = arith.constant 0 : index
    %191 = vector.load %arg13[%c0_62, %c0_63] : memref<1x32xf32, #tpu.memory_space<vmem>>, vector<1x32xf32>
    %192 = vector.broadcast %191 : vector<1x32xf32> to vector<16x32xf32>
    %193 = arith.addf %190, %192 : vector<16x32xf32>
    %194 = vector.shape_cast %193 : vector<16x32xf32> to vector<2x8x32xf32>
    %c0_64 = arith.constant 0 : index
    %c0_65 = arith.constant 0 : index
    %c0_66 = arith.constant 0 : index
    %195 = vector.load %arg14[%c0_64, %c0_65, %c0_66] : memref<2x8x32xf32, #tpu.memory_space<vmem>>, vector<2x8x32xf32>
    tpu.vector_store %arg14[%c0_64, %c0_65, %c0_66], %194 {strides = array<i32>} : memref<2x8x32xf32, #tpu.memory_space<vmem>>, vector<2x8x32xf32>,
    return
  }
  func.func @transform_0(%arg0: i32) -> (i32, i32, i32) {
    %c0_i32 = arith.constant 0 : i32
    %c0_i32_0 = arith.constant 0 : i32
    %c0_i32_1 = arith.constant 0 : i32
    return %arg0, %c0_i32, %c0_i32_0 : i32, i32, i32
  }
  func.func @transform_1(%arg0: i32) -> (i32, i32) {
    %c0_i32 = arith.constant 0 : i32
    %c0_i32_0 = arith.constant 0 : i32
    %c0_i32_1 = arith.constant 0 : i32
    return %c0_i32, %c0_i32_0 : i32, i32
  }
  func.func @transform_2(%arg0: i32) -> (i32, i32) {
    %c0_i32 = arith.constant 0 : i32
    %c0_i32_0 = arith.constant 0 : i32
    %c0_i32_1 = arith.constant 0 : i32
    return %c0_i32, %c0_i32_0 : i32, i32
  }
  func.func @transform_3(%arg0: i32) -> (i32, i32) {
    %c0_i32 = arith.constant 0 : i32
    %c0_i32_0 = arith.constant 0 : i32
    %c0_i32_1 = arith.constant 0 : i32
    return %c0_i32, %c0_i32_0 : i32, i32
  }
  func.func @transform_4(%arg0: i32) -> (i32, i32) {
    %c0_i32 = arith.constant 0 : i32
    %c0_i32_0 = arith.constant 0 : i32
    %c0_i32_1 = arith.constant 0 : i32
    return %c0_i32, %c0_i32_0 : i32, i32
  }
  func.func @transform_5(%arg0: i32) -> (i32, i32) {
    %c0_i32 = arith.constant 0 : i32
    %c0_i32_0 = arith.constant 0 : i32
    %c0_i32_1 = arith.constant 0 : i32
    return %c0_i32, %c0_i32_0 : i32, i32
  }
  func.func @transform_6(%arg0: i32) -> (i32, i32) {
    %c0_i32 = arith.constant 0 : i32
    %c0_i32_0 = arith.constant 0 : i32
    %c0_i32_1 = arith.constant 0 : i32
    return %c0_i32, %c0_i32_0 : i32, i32
  }
  func.func @transform_7(%arg0: i32) -> (i32, i32) {
    %c0_i32 = arith.constant 0 : i32
    %c0_i32_0 = arith.constant 0 : i32
    %c0_i32_1 = arith.constant 0 : i32
    return %c0_i32, %c0_i32_0 : i32, i32
  }
  func.func @transform_8(%arg0: i32) -> (i32, i32) {
    %c0_i32 = arith.constant 0 : i32
    %c0_i32_0 = arith.constant 0 : i32
    %c0_i32_1 = arith.constant 0 : i32
    return %c0_i32, %c0_i32_0 : i32, i32
  }
  func.func @transform_9(%arg0: i32) -> (i32, i32) {
    %c0_i32 = arith.constant 0 : i32
    %c0_i32_0 = arith.constant 0 : i32
    %c0_i32_1 = arith.constant 0 : i32
    return %c0_i32, %c0_i32_0 : i32, i32
  }
  func.func @transform_10(%arg0: i32) -> (i32, i32) {
    %c0_i32 = arith.constant 0 : i32
    %c0_i32_0 = arith.constant 0 : i32
    %c0_i32_1 = arith.constant 0 : i32
    return %c0_i32, %c0_i32_0 : i32, i32
  }
  func.func @transform_11(%arg0: i32) -> (i32, i32) {
    %c0_i32 = arith.constant 0 : i32
    %c0_i32_0 = arith.constant 0 : i32
    %c0_i32_1 = arith.constant 0 : i32
    return %c0_i32, %c0_i32_0 : i32, i32
  }
  func.func @transform_12(%arg0: i32) -> (i32, i32) {
    %c0_i32 = arith.constant 0 : i32
    %c0_i32_0 = arith.constant 0 : i32
    %c0_i32_1 = arith.constant 0 : i32
    return %c0_i32, %c0_i32_0 : i32, i32
  }
  func.func @transform_13(%arg0: i32) -> (i32, i32, i32) {
    %c0_i32 = arith.constant 0 : i32
    %c0_i32_0 = arith.constant 0 : i32
    %c0_i32_1 = arith.constant 0 : i32
    return %arg0, %c0_i32, %c0_i32_0 : i32, i32, i32
  }
}

</mosaic_0001>

<llo_original>
// kernel: tpu_custom_call.1
$region0: #{tpu_custom_call.1}
  #allocation0 [shape = 'u32[]', space=smem, size = 0x4, offset = 0x4, fixed_abs, tag = 'smem constant byte address 0x4 - core index']
  #allocation1 [shape = 'u32[144,128]{1,0:T(1,128)}', space=vmem, size = 0x12000, scoped, tag = 'internal scratch']
  %s0 = inlined_call_operand.vmem [shape: f32[2,8,32], index: 0, kind: input, shape index: {}]
  %s1 = inlined_call_operand.vmem [shape: f32[1,32], index: 1, kind: input, shape index: {}]
  %s2 = inlined_call_operand.vmem [shape: f32[1,32], index: 2, kind: input, shape index: {}]
  %s3 = inlined_call_operand.vmem [shape: bf16[32,96], index: 3, kind: input, shape index: {}]
  %s4 = inlined_call_operand.vmem [shape: f32[1,96], index: 4, kind: input, shape index: {}]
  %s5 = inlined_call_operand.vmem [shape: bf16[32,32], index: 5, kind: input, shape index: {}]
  %s6 = inlined_call_operand.vmem [shape: f32[1,32], index: 6, kind: input, shape index: {}]
  %s7 = inlined_call_operand.vmem [shape: f32[1,32], index: 7, kind: input, shape index: {}]
  %s8 = inlined_call_operand.vmem [shape: f32[1,32], index: 8, kind: input, shape index: {}]
  %s9 = inlined_call_operand.vmem [shape: bf16[32,128], index: 9, kind: input, shape index: {}]
  %s10 = inlined_call_operand.vmem [shape: f32[1,128], index: 10, kind: input, shape index: {}]
  %s11 = inlined_call_operand.vmem [shape: bf16[128,32], index: 11, kind: input, shape index: {}]
  %s12 = inlined_call_operand.vmem [shape: f32[1,32], index: 12, kind: input, shape index: {}]
  %s13 = inlined_call_operand.hbm [shape: f32[2,8,32], index: 13, kind: output, shape index: {}]
  %s14 = sld [smem:[#allocation0]]
  $region62: #{tpu_custom_call.1} parent=0
    _
  %s16 = ssub.s32 1, %s14
  %s17 = scalar_select 0, %s16, %s14
  $region1: #{tpu_custom_call.1} parent=0
    #allocation2 [shape = 'u8[8192]{0}', space=vmem, size = 0x2000, scoped, tag = 'output window, operand 0, single buffered']
    #allocation3 [shape = 's32[1]{0}', space=sflag, size = 0x4, scoped, tag = 'scoped memory for tpu_custom_call.1']
    %18 = vsyncpa [#allocation3], 0
    // Predicated region
    $region2: #{tpu_custom_call.1} parent=1 // pred_check
      _
    $region3: #{tpu_custom_call.1} parent=1 // pred_check_branch
      %20 = sbr.rel (0) target = $region5
    $region4: #{tpu_custom_call.1} parent=1 // pred_region
      _
    $region5: #{tpu_custom_call.1} parent=1 // pred_fallthru
      _
    // Predicated region
    $region6: #{tpu_custom_call.1} parent=1 // pred_check
      _
    $region7: #{tpu_custom_call.1} parent=1 // pred_check_branch
      %22 = sbr.rel (0) target = $region9
    $region8: #{tpu_custom_call.1} parent=1 // pred_region
      _
    $region9: #{tpu_custom_call.1} parent=1 // pred_fallthru
      _
    // Predicated region
    $region10: #{tpu_custom_call.1} parent=1 // pred_check
      _
    $region11: #{tpu_custom_call.1} parent=1 // pred_check_branch
      %24 = sbr.rel (0) target = $region13
    $region12: #{tpu_custom_call.1} parent=1 // pred_region
      _
    $region13: #{tpu_custom_call.1} parent=1 // pred_fallthru
      _
    // Predicated region
    $region14: #{tpu_custom_call.1} parent=1 // pred_check
      _
    $region15: #{tpu_custom_call.1} parent=1 // pred_check_branch
      %26 = sbr.rel (0) target = $region17
    $region16: #{tpu_custom_call.1} parent=1 // pred_region
      _
    $region17: #{tpu_custom_call.1} parent=1 // pred_fallthru
      _
    // Predicated region
    $region18: #{tpu_custom_call.1} parent=1 // pred_check
      _
    $region19: #{tpu_custom_call.1} parent=1 // pred_check_branch
      %28 = sbr.rel (0) target = $region21
    $region20: #{tpu_custom_call.1} parent=1 // pred_region
      _
    $region21: #{tpu_custom_call.1} parent=1 // pred_fallthru
      _
    // Predicated region
    $region22: #{tpu_custom_call.1} parent=1 // pred_check
      _
    $region23: #{tpu_custom_call.1} parent=1 // pred_check_branch
      %30 = sbr.rel (0) target = $region25
    $region24: #{tpu_custom_call.1} parent=1 // pred_region
      _
    $region25: #{tpu_custom_call.1} parent=1 // pred_fallthru
      _
    // Predicated region
    $region26: #{tpu_custom_call.1} parent=1 // pred_check
      _
    $region27: #{tpu_custom_call.1} parent=1 // pred_check_branch
      %32 = sbr.rel (0) target = $region29
    $region28: #{tpu_custom_call.1} parent=1 // pred_region
      _
    $region29: #{tpu_custom_call.1} parent=1 // pred_fallthru
      _
    // Predicated region
    $region30: #{tpu_custom_call.1} parent=1 // pred_check
      _
    $region31: #{tpu_custom_call.1} parent=1 // pred_check_branch
      %34 = sbr.rel (0) target = $region33
    $region32: #{tpu_custom_call.1} parent=1 // pred_region
      _
    $region33: #{tpu_custom_call.1} parent=1 // pred_fallthru
      _
    // Predicated region
    $region34: #{tpu_custom_call.1} parent=1 // pred_check
      _
    $region35: #{tpu_custom_call.1} parent=1 // pred_check_branch
      %36 = sbr.rel (0) target = $region37
    $region36: #{tpu_custom_call.1} parent=1 // pred_region
      _
    $region37: #{tpu_custom_call.1} parent=1 // pred_fallthru
      _
    // Predicated region
    $region38: #{tpu_custom_call.1} parent=1 // pred_check
      _
    $region39: #{tpu_custom_call.1} parent=1 // pred_check_branch
      %38 = sbr.rel (0) target = $region41
    $region40: #{tpu_custom_call.1} parent=1 // pred_region
      _
    $region41: #{tpu_custom_call.1} parent=1 // pred_fallthru
      _
    // Predicated region
    $region42: #{tpu_custom_call.1} parent=1 // pred_check
      _
    $region43: #{tpu_custom_call.1} parent=1 // pred_check_branch
      %40 = sbr.rel (0) target = $region45
    $region44: #{tpu_custom_call.1} parent=1 // pred_region
      _
    $region45: #{tpu_custom_call.1} parent=1 // pred_fallthru
      _
    // Predicated region
    $region46: #{tpu_custom_call.1} parent=1 // pred_check
      _
    $region47: #{tpu_custom_call.1} parent=1 // pred_check_branch
      %42 = sbr.rel (0) target = $region49
    $region48: #{tpu_custom_call.1} parent=1 // pred_region
      _
    $region49: #{tpu_custom_call.1} parent=1 // pred_fallthru
      _
    // Predicated region
    $region50: #{tpu_custom_call.1} parent=1 // pred_check
      _
    $region51: #{tpu_custom_call.1} parent=1 // pred_check_branch
      %44 = sbr.rel (0) target = $region53
    $region52: #{tpu_custom_call.1} parent=1 // pred_region
      _
    $region53: #{tpu_custom_call.1} parent=1 // pred_fallthru
      _
    %v46 = vld [vmem:[%s0] sm:$0xff]
    %v47 = vld [vmem:[%s0 + $0x8] sm:$0xff]
    %v48 = vld [vmem:[%s1] sm:$0x1]
    %v49 = vld [vmem:[%s2] sm:$0x1]
    %vm50 = vcmask 261120
    %v51 = vsel %vm50, %v46, 0.0
    %52 = vadd.xlane.f32.xlu0 %v51
    %v53 = vpop.xlane.xlu0 %52
    %v54 = vsel %vm50, %v47, 0.0
    %55 = vadd.xlane.f32.xlu0 %v54
    %v56 = vpop.xlane.xlu0 %55
    %v57 = vrcp.pop 32.0
    %v58 = vmul.f32 %v53, %v57
    %v59 = vmul.f32 %v56, %v57
    %v60 = vsub.f32 %v46, %v58
    %v61 = vsub.f32 %v47, %v59
    %v62 = vmul.f32 %v60, %v60
    %v63 = vmul.f32 %v61, %v61
    %v64 = vsel %vm50, %v62, 0.0
    %65 = vadd.xlane.f32.xlu0 %v64
    %v66 = vpop.xlane.xlu0 %65
    %v67 = vsel %vm50, %v63, 0.0
    %68 = vadd.xlane.f32.xlu0 %v67
    %v69 = vpop.xlane.xlu0 %68
    %v70 = vmul.f32 %v66, %v57
    %v71 = vmul.f32 %v69, %v57
    %v72 = vadd.f32 %v70, 1e-05
    %v73 = vadd.f32 %v71, 1e-05
    %v74 = vrsqrt.pop %v72
    %v75 = vrsqrt.pop %v73
    %v76 = vmul.f32 %v60, %v74
    %v77 = vmul.f32 %v61, %v75
    %v79 = vlaneseq
    %v80 = vshrl.u32 %v79, 7
    %v81 = vsub.s32 0, %v80
    %v82 = vrot.slane %v48, %v81
    %v84 = vmul.f32 %v76, %v82
    %v85 = vmul.f32 %v77, %v82
    %v87 = vlaneseq
    %v88 = vshrl.u32 %v87, 7
    %v89 = vsub.s32 0, %v88
    %v90 = vrot.slane %v49, %v89
    %v92 = vadd.f32 %v84, %v90
    %v93 = vadd.f32 %v85, %v90
    %v94 = vpack.c.bf16 %v93, %v92
    %v95 = vld [vmem:[%s3] sm:$0xf]
    %v96 = vld [vmem:[%s3 + $0x4] sm:$0xf]
    %v97 = vld [vmem:[%s3 + $0x8] sm:$0xf]
    %v98 = vld [vmem:[%s3 + $0xc] sm:$0xf]
    %v99 = vld [vmem:[%s4] sm:$0x1]
    %v101 = vlaneseq
    %v102 = vshrl.u32 %v101, 7
    %v103 = vsub.s32 0, %v102
    %v104 = vrot.slane %v99, %v103
    %v110 = vunpack.c.l.b16 %v95
    %v111 = vunpack.c.l.b16 %v96
    %v112 = vunpack.c.l.b16 %v97
    %v113 = vunpack.c.l.b16 %v98
    %v114 = vpack.c.b16 %v111, %v110
    %v115 = vpack.c.b16 %v113, %v112
    %v119 = vsel %vm50, %v94, 0
    %121 = vmatprep.subr.bf16.mxu0 0
    %122 = vmatpush1.bf16.msra.mxu0 %v114
    %123 = vmatprep.subr.bf16.mxu0 0
    %124 = vmatpush1.bf16.msra.mxu0 %v115
    %125 = vmatprep.subr.bf16.mxu0 0
    %126 = vmatpush1.bf16.msra.mxu0 0
    %127 = vmatprep.subr.bf16.mxu0 0
    %128 = vmatpush1.bf16.msra.mxu0 0
    %129 = vmatprep.subr.bf16.mxu0 0
    %130 = vmatpush1.bf16.msra.mxu0 0
    %131 = vmatprep.subr.bf16.mxu0 0
    %132 = vmatpush1.bf16.msra.mxu0 0
    %133 = vmatprep.subr.bf16.mxu0 0
    %134 = vmatpush1.bf16.msra.mxu0 0
    %135 = vmatprep.subr.bf16.mxu0 0
    %136 = vmatpush1.bf16.msra.mxu0 0
    %137 = vmatprep.subr.bf16.mxu0 0
    %138 = vmatpush1.bf16.msra.mxu0 0
    %139 = vmatprep.subr.bf16.mxu0 0
    %140 = vmatpush1.bf16.msra.mxu0 0
    %141 = vmatprep.subr.bf16.mxu0 0
    %142 = vmatpush1.bf16.msra.mxu0 0
    %143 = vmatprep.subr.bf16.mxu0 0
    %144 = vmatpush1.bf16.msra.mxu0 0
    %145 = vmatprep.subr.bf16.mxu0 0
    %146 = vmatpush1.bf16.msra.mxu0 0
    %147 = vmatprep.subr.bf16.mxu0 0
    %148 = vmatpush1.bf16.msra.mxu0 0
    %149 = vmatprep.subr.bf16.mxu0 0
    %150 = vmatpush1.bf16.msra.mxu0 0
    %151 = vmatprep.subr.bf16.mxu0 0
    %152 = vmatpush1.bf16.msra.mxu0 0
    %153 = vmatprep.mubr.bf16.mxu0 0
    %154 = vmatmul.mubr.bf16.gmra.mrb[0].mxu0 %v119
    %v155 = vpop.f32.mrb[0].mxu0
    %v156 = vadd.f32 %v104, %v155
    %v157 = vpop.f32.mrb[0].mxu0
    %v158 = vpop.f32.mrb[0].mxu0
    %v159 = vadd.f32 %v104, %v158
    %v160 = vpop.f32.mrb[0].mxu0
    %161 = vdwg.mxu0
    %v162 = vlaneseq
    %v163 = vshrl.u32 %v162, 7
    %v164 = vlaneseq
    %v165 = vand.u32 %v164, 127
    %vm166 = vcmp.le.s32.totalorder %v165, %v163
    %v167 = vsel %vm166, 0.0, -1e+30
    %v168 = vpack.c.bf16 %v156, %v156
    %v169 = vpack.c.bf16 %v159, %v159
    %171 = vrot.lane.b32.xlu0 %v168, 96
    %v172 = vpop.permute.xlu0 %171
    %vm173 = vcmask 64512
    %v175 = vsel %vm173, %v168, 0
    %v178 = vsel %vm173, %v172, 0
    %180 = vmatprep.subr.bf16.mxu0 0
    %181 = vmatpush1.bf16.xpose.msra.mxu0 %v178
    %182 = vmatprep.subr.bf16.mxu0 0
    %183 = vmatpush1.bf16.xpose.msra.mxu0 0
    %184 = vmatprep.subr.bf16.mxu0 0
    %185 = vmatpush1.bf16.xpose.msra.mxu0 0
    %186 = vmatprep.subr.bf16.mxu0 0
    %187 = vmatpush1.bf16.xpose.msra.mxu0 0
    %188 = vmatprep.subr.bf16.mxu0 0
    %189 = vmatpush1.bf16.xpose.msra.mxu0 0
    %190 = vmatprep.subr.bf16.mxu0 0
    %191 = vmatpush1.bf16.xpose.msra.mxu0 0
    %192 = vmatprep.subr.bf16.mxu0 0
    %193 = vmatpush1.bf16.xpose.msra.mxu0 0
    %194 = vmatprep.subr.bf16.mxu0 0
    %195 = vmatpush1.bf16.xpose.msra.mxu0 0
    %196 = vmatprep.subr.bf16.mxu0 0
    %197 = vmatpush1.bf16.xpose.msra.mxu0 0
    %198 = vmatprep.subr.bf16.mxu0 0
    %199 = vmatpush1.bf16.xpose.msra.mxu0 0
    %200 = vmatprep.subr.bf16.mxu0 0
    %201 = vmatpush1.bf16.xpose.msra.mxu0 0
    %202 = vmatprep.subr.bf16.mxu0 0
    %203 = vmatpush1.bf16.xpose.msra.mxu0 0
    %204 = vmatprep.subr.bf16.mxu0 0
    %205 = vmatpush1.bf16.xpose.msra.mxu0 0
    %206 = vmatprep.subr.bf16.mxu0 0
    %207 = vmatpush1.bf16.xpose.msra.mxu0 0
    %208 = vmatprep.subr.bf16.mxu0 0
    %209 = vmatpush1.bf16.xpose.msra.mxu0 0
    %210 = vmatprep.subr.bf16.mxu0 0
    %211 = vmatpush1.bf16.xpose.msra.mxu0 0
    %212 = vmatprep.mubr.bf16.mxu0 0
    %213 = vmatmul.mubr.bf16.gmra.mrb[0].mxu0 %v175
    %v214 = vpop.f32.mrb[0].mxu0
    %v215 = vadd.f32 0.0, %v214
    %v216 = vpop.f32.mrb[0].mxu0
    %v217 = vpop.f32.mrb[0].mxu0
    %v218 = vpop.f32.mrb[0].mxu0
    %219 = vdwg.mxu0
    %221 = vrot.lane.b32.xlu0 %v169, 96
    %v222 = vpop.permute.xlu0 %221
    %v224 = vsel %vm173, %v169, 0
    %v227 = vsel %vm173, %v222, 0
    %229 = vmatprep.subr.bf16.mxu0 0
    %230 = vmatpush1.bf16.xpose.msra.mxu0 %v227
    %231 = vmatprep.subr.bf16.mxu0 0
    %232 = vmatpush1.bf16.xpose.msra.mxu0 0
    %233 = vmatprep.subr.bf16.mxu0 0
    %234 = vmatpush1.bf16.xpose.msra.mxu0 0
    %235 = vmatprep.subr.bf16.mxu0 0
    %236 = vmatpush1.bf16.xpose.msra.mxu0 0
    %237 = vmatprep.subr.bf16.mxu0 0
    %238 = vmatpush1.bf16.xpose.msra.mxu0 0
    %239 = vmatprep.subr.bf16.mxu0 0
    %240 = vmatpush1.bf16.xpose.msra.mxu0 0
    %241 = vmatprep.subr.bf16.mxu0 0
    %242 = vmatpush1.bf16.xpose.msra.mxu0 0
    %243 = vmatprep.subr.bf16.mxu0 0
    %244 = vmatpush1.bf16.xpose.msra.mxu0 0
    %245 = vmatprep.subr.bf16.mxu0 0
    %246 = vmatpush1.bf16.xpose.msra.mxu0 0
    %247 = vmatprep.subr.bf16.mxu0 0
    %248 = vmatpush1.bf16.xpose.msra.mxu0 0
    %249 = vmatprep.subr.bf16.mxu0 0
    %250 = vmatpush1.bf16.xpose.msra.mxu0 0
    %251 = vmatprep.subr.bf16.mxu0 0
    %252 = vmatpush1.bf16.xpose.msra.mxu0 0
    %253 = vmatprep.subr.bf16.mxu0 0
    %254 = vmatpush1.bf16.xpose.msra.mxu0 0
    %255 = vmatprep.subr.bf16.mxu0 0
    %256 = vmatpush1.bf16.xpose.msra.mxu0 0
    %257 = vmatprep.subr.bf16.mxu0 0
    %258 = vmatpush1.bf16.xpose.msra.mxu0 0
    %259 = vmatprep.subr.bf16.mxu0 0
    %260 = vmatpush1.bf16.xpose.msra.mxu0 0
    %261 = vmatprep.mubr.bf16.mxu0 0
    %262 = vmatmul.mubr.bf16.gmra.mrb[0].mxu0 %v224
    %v263 = vpop.f32.mrb[0].mxu0
    %v264 = vadd.f32 0.0, %v263
    %v265 = vpop.f32.mrb[0].mxu0
    %v266 = vpop.f32.mrb[0].mxu0
    %v267 = vpop.f32.mrb[0].mxu0
    %268 = vdwg.mxu0
    %v269 = vmul.f32 %v215, 0.35355338
    %v270 = vmul.f32 %v264, 0.35355338
    %v271 = vadd.f32 %v269, %v167
    %v272 = vadd.f32 %v270, %v167
    %v273 = vsel %vm173, %v271, -inf
    %274 = vmax.xlane.f32.xlu0 %v273
    %v275 = vpop.xlane.xlu0 %274
    %v276 = vsel %vm173, %v272, -inf
    %277 = vmax.xlane.f32.xlu0 %v276
    %v278 = vpop.xlane.xlu0 %277
    %v279 = vsub.f32 %v271, %v275
    %v280 = vsub.f32 %v272, %v278
    %v281 = vmul.f32 %v279, 1.442695
    %v282 = vpow.pop %v281
    %v283 = vmul.f32 %v280, 1.442695
    %v284 = vpow.pop %v283
    %v285 = vsel %vm173, %v282, 0.0
    %286 = vadd.xlane.f32.xlu0 %v285
    %v287 = vpop.xlane.xlu0 %286
    %v288 = vsel %vm173, %v284, 0.0
    %289 = vadd.xlane.f32.xlu0 %v288
    %v290 = vpop.xlane.xlu0 %289
    %v291 = vrcp.pop %v287
    %v292 = vrcp.pop %v290
    %v293 = vmul.f32 %v282, %v291
    %v294 = vmul.f32 %v284, %v292
    %v295 = vpack.c.bf16 %v293, %v293
    %v296 = vpack.c.bf16 %v294, %v294
    %297 = vrot.lane.b32.xlu0 %v168, 64
    %v298 = vpop.permute.xlu0 %297
    %v300 = vsel %vm173, %v295, 0
    %vm302 = vcmask 1043456
    %v304 = vsel %vm302, %v298, 0
    %306 = vmatprep.subr.bf16.mxu0 0
    %307 = vmatpush1.bf16.msra.mxu0 %v304
    %308 = vmatprep.subr.bf16.mxu0 0
    %309 = vmatpush1.bf16.msra.mxu0 0
    %310 = vmatprep.subr.bf16.mxu0 0
    %311 = vmatpush1.bf16.msra.mxu0 0
    %312 = vmatprep.subr.bf16.mxu0 0
    %313 = vmatpush1.bf16.msra.mxu0 0
    %314 = vmatprep.subr.bf16.mxu0 0
    %315 = vmatpush1.bf16.msra.mxu0 0
    %316 = vmatprep.subr.bf16.mxu0 0
    %317 = vmatpush1.bf16.msra.mxu0 0
    %318 = vmatprep.subr.bf16.mxu0 0
    %319 = vmatpush1.bf16.msra.mxu0 0
    %320 = vmatprep.subr.bf16.mxu0 0
    %321 = vmatpush1.bf16.msra.mxu0 0
    %322 = vmatprep.subr.bf16.mxu0 0
    %323 = vmatpush1.bf16.msra.mxu0 0
    %324 = vmatprep.subr.bf16.mxu0 0
    %325 = vmatpush1.bf16.msra.mxu0 0
    %326 = vmatprep.subr.bf16.mxu0 0
    %327 = vmatpush1.bf16.msra.mxu0 0
    %328 = vmatprep.subr.bf16.mxu0 0
    %329 = vmatpush1.bf16.msra.mxu0 0
    %330 = vmatprep.subr.bf16.mxu0 0
    %331 = vmatpush1.bf16.msra.mxu0 0
    %332 = vmatprep.subr.bf16.mxu0 0
    %333 = vmatpush1.bf16.msra.mxu0 0
    %334 = vmatprep.subr.bf16.mxu0 0
    %335 = vmatpush1.bf16.msra.mxu0 0
    %336 = vmatprep.subr.bf16.mxu0 0
    %337 = vmatpush1.bf16.msra.mxu0 0
    %338 = vmatprep.mubr.bf16.mxu0 0
    %339 = vmatmul.mubr.bf16.gmra.mrb[0].mxu0 %v300
    %v340 = vpop.f32.mrb[0].mxu0
    %v341 = vadd.f32 0.0, %v340
    %v342 = vpop.f32.mrb[0].mxu0
    %v343 = vpop.f32.mrb[0].mxu0
    %v344 = vpop.f32.mrb[0].mxu0
    %345 = vdwg.mxu0
    %346 = vrot.lane.b32.xlu0 %v169, 64
    %v347 = vpop.permute.xlu0 %346
    %v349 = vsel %vm173, %v296, 0
    %v352 = vsel %vm302, %v347, 0
    %354 = vmatprep.subr.bf16.mxu0 0
    %355 = vmatpush1.bf16.msra.mxu0 %v352
    %356 = vmatprep.subr.bf16.mxu0 0
    %357 = vmatpush1.bf16.msra.mxu0 0
    %358 = vmatprep.subr.bf16.mxu0 0
    %359 = vmatpush1.bf16.msra.mxu0 0
    %360 = vmatprep.subr.bf16.mxu0 0
    %361 = vmatpush1.bf16.msra.mxu0 0
    %362 = vmatprep.subr.bf16.mxu0 0
    %363 = vmatpush1.bf16.msra.mxu0 0
    %364 = vmatprep.subr.bf16.mxu0 0
    %365 = vmatpush1.bf16.msra.mxu0 0
    %366 = vmatprep.subr.bf16.mxu0 0
    %367 = vmatpush1.bf16.msra.mxu0 0
    %368 = vmatprep.subr.bf16.mxu0 0
    %369 = vmatpush1.bf16.msra.mxu0 0
    %370 = vmatprep.subr.bf16.mxu0 0
    %371 = vmatpush1.bf16.msra.mxu0 0
    %372 = vmatprep.subr.bf16.mxu0 0
    %373 = vmatpush1.bf16.msra.mxu0 0
    %374 = vmatprep.subr.bf16.mxu0 0
    %375 = vmatpush1.bf16.msra.mxu0 0
    %376 = vmatprep.subr.bf16.mxu0 0
    %377 = vmatpush1.bf16.msra.mxu0 0
    %378 = vmatprep.subr.bf16.mxu0 0
    %379 = vmatpush1.bf16.msra.mxu0 0
    %380 = vmatprep.subr.bf16.mxu0 0
    %381 = vmatpush1.bf16.msra.mxu0 0
    %382 = vmatprep.subr.bf16.mxu0 0
    %383 = vmatpush1.bf16.msra.mxu0 0
    %384 = vmatprep.subr.bf16.mxu0 0
    %385 = vmatpush1.bf16.msra.mxu0 0
    %386 = vmatprep.mubr.bf16.mxu0 0
    %387 = vmatmul.mubr.bf16.gmra.mrb[0].mxu0 %v349
    %v388 = vpop.f32.mrb[0].mxu0
    %v389 = vadd.f32 0.0, %v388
    %v390 = vpop.f32.mrb[0].mxu0
    %v391 = vpop.f32.mrb[0].mxu0
    %v392 = vpop.f32.mrb[0].mxu0
    %393 = vdwg.mxu0
    %394 = vrot.lane.b32.xlu0 %v168, 120
    %v395 = vpop.permute.xlu0 %394
    %396 = vrot.lane.b32.xlu0 %v168, 88
    %v397 = vpop.permute.xlu0 %396
    %v399 = vsel %vm173, %v395, 0
    %v402 = vsel %vm173, %v397, 0
    %404 = vmatprep.subr.bf16.mxu0 0
    %405 = vmatpush1.bf16.xpose.msra.mxu0 %v402
    %406 = vmatprep.subr.bf16.mxu0 0
    %407 = vmatpush1.bf16.xpose.msra.mxu0 0
    %408 = vmatprep.subr.bf16.mxu0 0
    %409 = vmatpush1.bf16.xpose.msra.mxu0 0
    %410 = vmatprep.subr.bf16.mxu0 0
    %411 = vmatpush1.bf16.xpose.msra.mxu0 0
    %412 = vmatprep.subr.bf16.mxu0 0
    %413 = vmatpush1.bf16.xpose.msra.mxu0 0
    %414 = vmatprep.subr.bf16.mxu0 0
    %415 = vmatpush1.bf16.xpose.msra.mxu0 0
    %416 = vmatprep.subr.bf16.mxu0 0
    %417 = vmatpush1.bf16.xpose.msra.mxu0 0
    %418 = vmatprep.subr.bf16.mxu0 0
    %419 = vmatpush1.bf16.xpose.msra.mxu0 0
    %420 = vmatprep.subr.bf16.mxu0 0
    %421 = vmatpush1.bf16.xpose.msra.mxu0 0
    %422 = vmatprep.subr.bf16.mxu0 0
    %423 = vmatpush1.bf16.xpose.msra.mxu0 0
    %424 = vmatprep.subr.bf16.mxu0 0
    %425 = vmatpush1.bf16.xpose.msra.mxu0 0
    %426 = vmatprep.subr.bf16.mxu0 0
    %427 = vmatpush1.bf16.xpose.msra.mxu0 0
    %428 = vmatprep.subr.bf16.mxu0 0
    %429 = vmatpush1.bf16.xpose.msra.mxu0 0
    %430 = vmatprep.subr.bf16.mxu0 0
    %431 = vmatpush1.bf16.xpose.msra.mxu0 0
    %432 = vmatprep.subr.bf16.mxu0 0
    %433 = vmatpush1.bf16.xpose.msra.mxu0 0
    %434 = vmatprep.subr.bf16.mxu0 0
    %435 = vmatpush1.bf16.xpose.msra.mxu0 0
    %436 = vmatprep.mubr.bf16.mxu0 0
    %437 = vmatmul.mubr.bf16.gmra.mrb[0].mxu0 %v399
    %v438 = vpop.f32.mrb[0].mxu0
    %v439 = vadd.f32 0.0, %v438
    %v440 = vpop.f32.mrb[0].mxu0
    %v441 = vpop.f32.mrb[0].mxu0
    %v442 = vpop.f32.mrb[0].mxu0
    %443 = vdwg.mxu0
    %444 = vrot.lane.b32.xlu0 %v169, 120
    %v445 = vpop.permute.xlu0 %444
    %446 = vrot.lane.b32.xlu0 %v169, 88
    %v447 = vpop.permute.xlu0 %446
    %v449 = vsel %vm173, %v445, 0
    %v452 = vsel %vm173, %v447, 0
    %454 = vmatprep.subr.bf16.mxu0 0
    %455 = vmatpush1.bf16.xpose.msra.mxu0 %v452
    %456 = vmatprep.subr.bf16.mxu0 0
    %457 = vmatpush1.bf16.xpose.msra.mxu0 0
    %458 = vmatprep.subr.bf16.mxu0 0
    %459 = vmatpush1.bf16.xpose.msra.mxu0 0
    %460 = vmatprep.subr.bf16.mxu0 0
    %461 = vmatpush1.bf16.xpose.msra.mxu0 0
    %462 = vmatprep.subr.bf16.mxu0 0
    %463 = vmatpush1.bf16.xpose.msra.mxu0 0
    %464 = vmatprep.subr.bf16.mxu0 0
    %465 = vmatpush1.bf16.xpose.msra.mxu0 0
    %466 = vmatprep.subr.bf16.mxu0 0
    %467 = vmatpush1.bf16.xpose.msra.mxu0 0
    %468 = vmatprep.subr.bf16.mxu0 0
    %469 = vmatpush1.bf16.xpose.msra.mxu0 0
    %470 = vmatprep.subr.bf16.mxu0 0
    %471 = vmatpush1.bf16.xpose.msra.mxu0 0
    %472 = vmatprep.subr.bf16.mxu0 0
    %473 = vmatpush1.bf16.xpose.msra.mxu0 0
    %474 = vmatprep.subr.bf16.mxu0 0
    %475 = vmatpush1.bf16.xpose.msra.mxu0 0
    %476 = vmatprep.subr.bf16.mxu0 0
    %477 = vmatpush1.bf16.xpose.msra.mxu0 0
    %478 = vmatprep.subr.bf16.mxu0 0
    %479 = vmatpush1.bf16.xpose.msra.mxu0 0
    %480 = vmatprep.subr.bf16.mxu0 0
    %481 = vmatpush1.bf16.xpose.msra.mxu0 0
    %482 = vmatprep.subr.bf16.mxu0 0
    %483 = vmatpush1.bf16.xpose.msra.mxu0 0
    %484 = vmatprep.subr.bf16.mxu0 0
    %485 = vmatpush1.bf16.xpose.msra.mxu0 0
    %486 = vmatprep.mubr.bf16.mxu0 0
    %487 = vmatmul.mubr.bf16.gmra.mrb[0].mxu0 %v449
    %v488 = vpop.f32.mrb[0].mxu0
    %v489 = vadd.f32 0.0, %v488
    %v490 = vpop.f32.mrb[0].mxu0
    %v491 = vpop.f32.mrb[0].mxu0
    %v492 = vpop.f32.mrb[0].mxu0
    %493 = vdwg.mxu0
    %v494 = vmul.f32 %v439, 0.35355338
    %v495 = vmul.f32 %v489, 0.35355338
    %v496 = vadd.f32 %v494, %v167
    %v497 = vadd.f32 %v495, %v167
    %v498 = vsel %vm173, %v496, -inf
    %499 = vmax.xlane.f32.xlu0 %v498
    %v500 = vpop.xlane.xlu0 %499
    %v501 = vsel %vm173, %v497, -inf
    %502 = vmax.xlane.f32.xlu0 %v501
    %v503 = vpop.xlane.xlu0 %502
    %v504 = vsub.f32 %v496, %v500
    %v505 = vsub.f32 %v497, %v503
    %v506 = vmul.f32 %v504, 1.442695
    %v507 = vpow.pop %v506
    %v508 = vmul.f32 %v505, 1.442695
    %v509 = vpow.pop %v508
    %v510 = vsel %vm173, %v507, 0.0
    %511 = vadd.xlane.f32.xlu0 %v510
    %v512 = vpop.xlane.xlu0 %511
    %v513 = vsel %vm173, %v509, 0.0
    %514 = vadd.xlane.f32.xlu0 %v513
    %v515 = vpop.xlane.xlu0 %514
    %v516 = vrcp.pop %v512
    %v517 = vrcp.pop %v515
    %v518 = vmul.f32 %v507, %v516
    %v519 = vmul.f32 %v509, %v517
    %v520 = vpack.c.bf16 %v518, %v518
    %v521 = vpack.c.bf16 %v519, %v519
    %522 = vrot.lane.b32.xlu0 %v168, 56
    %v523 = vpop.permute.xlu0 %522
    %v525 = vsel %vm173, %v520, 0
    %v528 = vsel %vm302, %v523, 0
    %530 = vmatprep.subr.bf16.mxu0 0
    %531 = vmatpush1.bf16.msra.mxu0 %v528
    %532 = vmatprep.subr.bf16.mxu0 0
    %533 = vmatpush1.bf16.msra.mxu0 0
    %534 = vmatprep.subr.bf16.mxu0 0
    %535 = vmatpush1.bf16.msra.mxu0 0
    %536 = vmatprep.subr.bf16.mxu0 0
    %537 = vmatpush1.bf16.msra.mxu0 0
    %538 = vmatprep.subr.bf16.mxu0 0
    %539 = vmatpush1.bf16.msra.mxu0 0
    %540 = vmatprep.subr.bf16.mxu0 0
    %541 = vmatpush1.bf16.msra.mxu0 0
    %542 = vmatprep.subr.bf16.mxu0 0
    %543 = vmatpush1.bf16.msra.mxu0 0
    %544 = vmatprep.subr.bf16.mxu0 0
    %545 = vmatpush1.bf16.msra.mxu0 0
    %546 = vmatprep.subr.bf16.mxu0 0
    %547 = vmatpush1.bf16.msra.mxu0 0
    %548 = vmatprep.subr.bf16.mxu0 0
    %549 = vmatpush1.bf16.msra.mxu0 0
    %550 = vmatprep.subr.bf16.mxu0 0
    %551 = vmatpush1.bf16.msra.mxu0 0
    %552 = vmatprep.subr.bf16.mxu0 0
    %553 = vmatpush1.bf16.msra.mxu0 0
    %554 = vmatprep.subr.bf16.mxu0 0
    %555 = vmatpush1.bf16.msra.mxu0 0
    %556 = vmatprep.subr.bf16.mxu0 0
    %557 = vmatpush1.bf16.msra.mxu0 0
    %558 = vmatprep.subr.bf16.mxu0 0
    %559 = vmatpush1.bf16.msra.mxu0 0
    %560 = vmatprep.subr.bf16.mxu0 0
    %561 = vmatpush1.bf16.msra.mxu0 0
    %562 = vmatprep.mubr.bf16.mxu0 0
    %563 = vmatmul.mubr.bf16.gmra.mrb[0].mxu0 %v525
    %v564 = vpop.f32.mrb[0].mxu0
    %v565 = vadd.f32 0.0, %v564
    %v566 = vpop.f32.mrb[0].mxu0
    %v567 = vpop.f32.mrb[0].mxu0
    %v568 = vpop.f32.mrb[0].mxu0
    %569 = vdwg.mxu0
    %570 = vrot.lane.b32.xlu0 %v169, 56
    %v571 = vpop.permute.xlu0 %570
    %v573 = vsel %vm173, %v521, 0
    %v576 = vsel %vm302, %v571, 0
    %578 = vmatprep.subr.bf16.mxu0 0
    %579 = vmatpush1.bf16.msra.mxu0 %v576
    %580 = vmatprep.subr.bf16.mxu0 0
    %581 = vmatpush1.bf16.msra.mxu0 0
    %582 = vmatprep.subr.bf16.mxu0 0
    %583 = vmatpush1.bf16.msra.mxu0 0
    %584 = vmatprep.subr.bf16.mxu0 0
    %585 = vmatpush1.bf16.msra.mxu0 0
    %586 = vmatprep.subr.bf16.mxu0 0
    %587 = vmatpush1.bf16.msra.mxu0 0
    %588 = vmatprep.subr.bf16.mxu0 0
    %589 = vmatpush1.bf16.msra.mxu0 0
    %590 = vmatprep.subr.bf16.mxu0 0
    %591 = vmatpush1.bf16.msra.mxu0 0
    %592 = vmatprep.subr.bf16.mxu0 0
    %593 = vmatpush1.bf16.msra.mxu0 0
    %594 = vmatprep.subr.bf16.mxu0 0
    %595 = vmatpush1.bf16.msra.mxu0 0
    %596 = vmatprep.subr.bf16.mxu0 0
    %597 = vmatpush1.bf16.msra.mxu0 0
    %598 = vmatprep.subr.bf16.mxu0 0
    %599 = vmatpush1.bf16.msra.mxu0 0
    %600 = vmatprep.subr.bf16.mxu0 0
    %601 = vmatpush1.bf16.msra.mxu0 0
    %602 = vmatprep.subr.bf16.mxu0 0
    %603 = vmatpush1.bf16.msra.mxu0 0
    %604 = vmatprep.subr.bf16.mxu0 0
    %605 = vmatpush1.bf16.msra.mxu0 0
    %606 = vmatprep.subr.bf16.mxu0 0
    %607 = vmatpush1.bf16.msra.mxu0 0
    %608 = vmatprep.subr.bf16.mxu0 0
    %609 = vmatpush1.bf16.msra.mxu0 0
    %610 = vmatprep.mubr.bf16.mxu0 0
    %611 = vmatmul.mubr.bf16.gmra.mrb[0].mxu0 %v573
    %v612 = vpop.f32.mrb[0].mxu0
    %v613 = vadd.f32 0.0, %v612
    %v614 = vpop.f32.mrb[0].mxu0
    %v615 = vpop.f32.mrb[0].mxu0
    %v616 = vpop.f32.mrb[0].mxu0
    %617 = vdwg.mxu0
    %618 = vrot.lane.b32.xlu0 %v168, 112
    %v619 = vpop.permute.xlu0 %618
    %620 = vrot.lane.b32.xlu0 %v168, 80
    %v621 = vpop.permute.xlu0 %620
    %v623 = vsel %vm173, %v619, 0
    %v626 = vsel %vm173, %v621, 0
    %628 = vmatprep.subr.bf16.mxu0 0
    %629 = vmatpush1.bf16.xpose.msra.mxu0 %v626
    %630 = vmatprep.subr.bf16.mxu0 0
    %631 = vmatpush1.bf16.xpose.msra.mxu0 0
    %632 = vmatprep.subr.bf16.mxu0 0
    %633 = vmatpush1.bf16.xpose.msra.mxu0 0
    %634 = vmatprep.subr.bf16.mxu0 0
    %635 = vmatpush1.bf16.xpose.msra.mxu0 0
    %636 = vmatprep.subr.bf16.mxu0 0
    %637 = vmatpush1.bf16.xpose.msra.mxu0 0
    %638 = vmatprep.subr.bf16.mxu0 0
    %639 = vmatpush1.bf16.xpose.msra.mxu0 0
    %640 = vmatprep.subr.bf16.mxu0 0
    %641 = vmatpush1.bf16.xpose.msra.mxu0 0
    %642 = vmatprep.subr.bf16.mxu0 0
    %643 = vmatpush1.bf16.xpose.msra.mxu0 0
    %644 = vmatprep.subr.bf16.mxu0 0
    %645 = vmatpush1.bf16.xpose.msra.mxu0 0
    %646 = vmatprep.subr.bf16.mxu0 0
    %647 = vmatpush1.bf16.xpose.msra.mxu0 0
    %648 = vmatprep.subr.bf16.mxu0 0
    %649 = vmatpush1.bf16.xpose.msra.mxu0 0
    %650 = vmatprep.subr.bf16.mxu0 0
    %651 = vmatpush1.bf16.xpose.msra.mxu0 0
    %652 = vmatprep.subr.bf16.mxu0 0
    %653 = vmatpush1.bf16.xpose.msra.mxu0 0
    %654 = vmatprep.subr.bf16.mxu0 0
    %655 = vmatpush1.bf16.xpose.msra.mxu0 0
    %656 = vmatprep.subr.bf16.mxu0 0
    %657 = vmatpush1.bf16.xpose.msra.mxu0 0
    %658 = vmatprep.subr.bf16.mxu0 0
    %659 = vmatpush1.bf16.xpose.msra.mxu0 0
    %660 = vmatprep.mubr.bf16.mxu0 0
    %661 = vmatmul.mubr.bf16.gmra.mrb[0].mxu0 %v623
    %v662 = vpop.f32.mrb[0].mxu0
    %v663 = vadd.f32 0.0, %v662
    %v664 = vpop.f32.mrb[0].mxu0
    %v665 = vpop.f32.mrb[0].mxu0
    %v666 = vpop.f32.mrb[0].mxu0
    %667 = vdwg.mxu0
    %668 = vrot.lane.b32.xlu0 %v169, 112
    %v669 = vpop.permute.xlu0 %668
    %670 = vrot.lane.b32.xlu0 %v169, 80
    %v671 = vpop.permute.xlu0 %670
    %v673 = vsel %vm173, %v669, 0
    %v676 = vsel %vm173, %v671, 0
    %678 = vmatprep.subr.bf16.mxu0 0
    %679 = vmatpush1.bf16.xpose.msra.mxu0 %v676
    %680 = vmatprep.subr.bf16.mxu0 0
    %681 = vmatpush1.bf16.xpose.msra.mxu0 0
    %682 = vmatprep.subr.bf16.mxu0 0
    %683 = vmatpush1.bf16.xpose.msra.mxu0 0
    %684 = vmatprep.subr.bf16.mxu0 0
    %685 = vmatpush1.bf16.xpose.msra.mxu0 0
    %686 = vmatprep.subr.bf16.mxu0 0
    %687 = vmatpush1.bf16.xpose.msra.mxu0 0
    %688 = vmatprep.subr.bf16.mxu0 0
    %689 = vmatpush1.bf16.xpose.msra.mxu0 0
    %690 = vmatprep.subr.bf16.mxu0 0
    %691 = vmatpush1.bf16.xpose.msra.mxu0 0
    %692 = vmatprep.subr.bf16.mxu0 0
    %693 = vmatpush1.bf16.xpose.msra.mxu0 0
    %694 = vmatprep.subr.bf16.mxu0 0
    %695 = vmatpush1.bf16.xpose.msra.mxu0 0
    %696 = vmatprep.subr.bf16.mxu0 0
    %697 = vmatpush1.bf16.xpose.msra.mxu0 0
    %698 = vmatprep.subr.bf16.mxu0 0
    %699 = vmatpush1.bf16.xpose.msra.mxu0 0
    %700 = vmatprep.subr.bf16.mxu0 0
    %701 = vmatpush1.bf16.xpose.msra.mxu0 0
    %702 = vmatprep.subr.bf16.mxu0 0
    %703 = vmatpush1.bf16.xpose.msra.mxu0 0
    %704 = vmatprep.subr.bf16.mxu0 0
    %705 = vmatpush1.bf16.xpose.msra.mxu0 0
    %706 = vmatprep.subr.bf16.mxu0 0
    %707 = vmatpush1.bf16.xpose.msra.mxu0 0
    %708 = vmatprep.subr.bf16.mxu0 0
    %709 = vmatpush1.bf16.xpose.msra.mxu0 0
    %710 = vmatprep.mubr.bf16.mxu0 0
    %711 = vmatmul.mubr.bf16.gmra.mrb[0].mxu0 %v673
    %v712 = vpop.f32.mrb[0].mxu0
    %v713 = vadd.f32 0.0, %v712
    %v714 = vpop.f32.mrb[0].mxu0
    %v715 = vpop.f32.mrb[0].mxu0
    %v716 = vpop.f32.mrb[0].mxu0
    %717 = vdwg.mxu0
    %v718 = vmul.f32 %v663, 0.35355338
    %v719 = vmul.f32 %v713, 0.35355338
    %v720 = vadd.f32 %v718, %v167
    %v721 = vadd.f32 %v719, %v167
    %v722 = vsel %vm173, %v720, -inf
    %723 = vmax.xlane.f32.xlu0 %v722
    %v724 = vpop.xlane.xlu0 %723
    %v725 = vsel %vm173, %v721, -inf
    %726 = vmax.xlane.f32.xlu0 %v725
    %v727 = vpop.xlane.xlu0 %726
    %v728 = vsub.f32 %v720, %v724
    %v729 = vsub.f32 %v721, %v727
    %v730 = vmul.f32 %v728, 1.442695
    %v731 = vpow.pop %v730
    %v732 = vmul.f32 %v729, 1.442695
    %v733 = vpow.pop %v732
    %v734 = vsel %vm173, %v731, 0.0
    %735 = vadd.xlane.f32.xlu0 %v734
    %v736 = vpop.xlane.xlu0 %735
    %v737 = vsel %vm173, %v733, 0.0
    %738 = vadd.xlane.f32.xlu0 %v737
    %v739 = vpop.xlane.xlu0 %738
    %v740 = vrcp.pop %v736
    %v741 = vrcp.pop %v739
    %v742 = vmul.f32 %v731, %v740
    %v743 = vmul.f32 %v733, %v741
    %v744 = vpack.c.bf16 %v742, %v742
    %v745 = vpack.c.bf16 %v743, %v743
    %746 = vrot.lane.b32.xlu0 %v168, 48
    %v747 = vpop.permute.xlu0 %746
    %v749 = vsel %vm173, %v744, 0
    %v752 = vsel %vm302, %v747, 0
    %754 = vmatprep.subr.bf16.mxu0 0
    %755 = vmatpush1.bf16.msra.mxu0 %v752
    %756 = vmatprep.subr.bf16.mxu0 0
    %757 = vmatpush1.bf16.msra.mxu0 0
    %758 = vmatprep.subr.bf16.mxu0 0
    %759 = vmatpush1.bf16.msra.mxu0 0
    %760 = vmatprep.subr.bf16.mxu0 0
    %761 = vmatpush1.bf16.msra.mxu0 0
    %762 = vmatprep.subr.bf16.mxu0 0
    %763 = vmatpush1.bf16.msra.mxu0 0
    %764 = vmatprep.subr.bf16.mxu0 0
    %765 = vmatpush1.bf16.msra.mxu0 0
    %766 = vmatprep.subr.bf16.mxu0 0
    %767 = vmatpush1.bf16.msra.mxu0 0
    %768 = vmatprep.subr.bf16.mxu0 0
    %769 = vmatpush1.bf16.msra.mxu0 0
    %770 = vmatprep.subr.bf16.mxu0 0
    %771 = vmatpush1.bf16.msra.mxu0 0
    %772 = vmatprep.subr.bf16.mxu0 0
    %773 = vmatpush1.bf16.msra.mxu0 0
    %774 = vmatprep.subr.bf16.mxu0 0
    %775 = vmatpush1.bf16.msra.mxu0 0
    %776 = vmatprep.subr.bf16.mxu0 0
    %777 = vmatpush1.bf16.msra.mxu0 0
    %778 = vmatprep.subr.bf16.mxu0 0
    %779 = vmatpush1.bf16.msra.mxu0 0
    %780 = vmatprep.subr.bf16.mxu0 0
    %781 = vmatpush1.bf16.msra.mxu0 0
    %782 = vmatprep.subr.bf16.mxu0 0
    %783 = vmatpush1.bf16.msra.mxu0 0
    %784 = vmatprep.subr.bf16.mxu0 0
    %785 = vmatpush1.bf16.msra.mxu0 0
    %786 = vmatprep.mubr.bf16.mxu0 0
    %787 = vmatmul.mubr.bf16.gmra.mrb[0].mxu0 %v749
    %v788 = vpop.f32.mrb[0].mxu0
    %v789 = vadd.f32 0.0, %v788
    %v790 = vpop.f32.mrb[0].mxu0
    %v791 = vpop.f32.mrb[0].mxu0
    %v792 = vpop.f32.mrb[0].mxu0
    %793 = vdwg.mxu0
    %794 = vrot.lane.b32.xlu0 %v169, 48
    %v795 = vpop.permute.xlu0 %794
    %v797 = vsel %vm173, %v745, 0
    %v800 = vsel %vm302, %v795, 0
    %802 = vmatprep.subr.bf16.mxu0 0
    %803 = vmatpush1.bf16.msra.mxu0 %v800
    %804 = vmatprep.subr.bf16.mxu0 0
    %805 = vmatpush1.bf16.msra.mxu0 0
    %806 = vmatprep.subr.bf16.mxu0 0
    %807 = vmatpush1.bf16.msra.mxu0 0
    %808 = vmatprep.subr.bf16.mxu0 0
    %809 = vmatpush1.bf16.msra.mxu0 0
    %810 = vmatprep.subr.bf16.mxu0 0
    %811 = vmatpush1.bf16.msra.mxu0 0
    %812 = vmatprep.subr.bf16.mxu0 0
    %813 = vmatpush1.bf16.msra.mxu0 0
    %814 = vmatprep.subr.bf16.mxu0 0
    %815 = vmatpush1.bf16.msra.mxu0 0
    %816 = vmatprep.subr.bf16.mxu0 0
    %817 = vmatpush1.bf16.msra.mxu0 0
    %818 = vmatprep.subr.bf16.mxu0 0
    %819 = vmatpush1.bf16.msra.mxu0 0
    %820 = vmatprep.subr.bf16.mxu0 0
    %821 = vmatpush1.bf16.msra.mxu0 0
    %822 = vmatprep.subr.bf16.mxu0 0
    %823 = vmatpush1.bf16.msra.mxu0 0
    %824 = vmatprep.subr.bf16.mxu0 0
    %825 = vmatpush1.bf16.msra.mxu0 0
    %826 = vmatprep.subr.bf16.mxu0 0
    %827 = vmatpush1.bf16.msra.mxu0 0
    %828 = vmatprep.subr.bf16.mxu0 0
    %829 = vmatpush1.bf16.msra.mxu0 0
    %830 = vmatprep.subr.bf16.mxu0 0
    %831 = vmatpush1.bf16.msra.mxu0 0
    %832 = vmatprep.subr.bf16.mxu0 0
    %833 = vmatpush1.bf16.msra.mxu0 0
    %834 = vmatprep.mubr.bf16.mxu0 0
    %835 = vmatmul.mubr.bf16.gmra.mrb[0].mxu0 %v797
    %v836 = vpop.f32.mrb[0].mxu0
    %v837 = vadd.f32 0.0, %v836
    %v838 = vpop.f32.mrb[0].mxu0
    %v839 = vpop.f32.mrb[0].mxu0
    %v840 = vpop.f32.mrb[0].mxu0
    %841 = vdwg.mxu0
    %842 = vrot.lane.b32.xlu0 %v168, 104
    %v843 = vpop.permute.xlu0 %842
    %844 = vrot.lane.b32.xlu0 %v168, 72
    %v845 = vpop.permute.xlu0 %844
    %v847 = vsel %vm173, %v843, 0
    %v850 = vsel %vm173, %v845, 0
    %852 = vmatprep.subr.bf16.mxu0 0
    %853 = vmatpush1.bf16.xpose.msra.mxu0 %v850
    %854 = vmatprep.subr.bf16.mxu0 0
    %855 = vmatpush1.bf16.xpose.msra.mxu0 0
    %856 = vmatprep.subr.bf16.mxu0 0
    %857 = vmatpush1.bf16.xpose.msra.mxu0 0
    %858 = vmatprep.subr.bf16.mxu0 0
    %859 = vmatpush1.bf16.xpose.msra.mxu0 0
    %860 = vmatprep.subr.bf16.mxu0 0
    %861 = vmatpush1.bf16.xpose.msra.mxu0 0
    %862 = vmatprep.subr.bf16.mxu0 0
    %863 = vmatpush1.bf16.xpose.msra.mxu0 0
    %864 = vmatprep.subr.bf16.mxu0 0
    %865 = vmatpush1.bf16.xpose.msra.mxu0 0
    %866 = vmatprep.subr.bf16.mxu0 0
    %867 = vmatpush1.bf16.xpose.msra.mxu0 0
    %868 = vmatprep.subr.bf16.mxu0 0
    %869 = vmatpush1.bf16.xpose.msra.mxu0 0
    %870 = vmatprep.subr.bf16.mxu0 0
    %871 = vmatpush1.bf16.xpose.msra.mxu0 0
    %872 = vmatprep.subr.bf16.mxu0 0
    %873 = vmatpush1.bf16.xpose.msra.mxu0 0
    %874 = vmatprep.subr.bf16.mxu0 0
    %875 = vmatpush1.bf16.xpose.msra.mxu0 0
    %876 = vmatprep.subr.bf16.mxu0 0
    %877 = vmatpush1.bf16.xpose.msra.mxu0 0
    %878 = vmatprep.subr.bf16.mxu0 0
    %879 = vmatpush1.bf16.xpose.msra.mxu0 0
    %880 = vmatprep.subr.bf16.mxu0 0
    %881 = vmatpush1.bf16.xpose.msra.mxu0 0
    %882 = vmatprep.subr.bf16.mxu0 0
    %883 = vmatpush1.bf16.xpose.msra.mxu0 0
    %884 = vmatprep.mubr.bf16.mxu0 0
    %885 = vmatmul.mubr.bf16.gmra.mrb[0].mxu0 %v847
    %v886 = vpop.f32.mrb[0].mxu0
    %v887 = vadd.f32 0.0, %v886
    %v888 = vpop.f32.mrb[0].mxu0
    %v889 = vpop.f32.mrb[0].mxu0
    %v890 = vpop.f32.mrb[0].mxu0
    %891 = vdwg.mxu0
    %892 = vrot.lane.b32.xlu0 %v169, 104
    %v893 = vpop.permute.xlu0 %892
    %894 = vrot.lane.b32.xlu0 %v169, 72
    %v895 = vpop.permute.xlu0 %894
    %v897 = vsel %vm173, %v893, 0
    %v900 = vsel %vm173, %v895, 0
    %902 = vmatprep.subr.bf16.mxu0 0
    %903 = vmatpush1.bf16.xpose.msra.mxu0 %v900
    %904 = vmatprep.subr.bf16.mxu0 0
    %905 = vmatpush1.bf16.xpose.msra.mxu0 0
    %906 = vmatprep.subr.bf16.mxu0 0
    %907 = vmatpush1.bf16.xpose.msra.mxu0 0
    %908 = vmatprep.subr.bf16.mxu0 0
    %909 = vmatpush1.bf16.xpose.msra.mxu0 0
    %910 = vmatprep.subr.bf16.mxu0 0
    %911 = vmatpush1.bf16.xpose.msra.mxu0 0
    %912 = vmatprep.subr.bf16.mxu0 0
    %913 = vmatpush1.bf16.xpose.msra.mxu0 0
    %914 = vmatprep.subr.bf16.mxu0 0
    %915 = vmatpush1.bf16.xpose.msra.mxu0 0
    %916 = vmatprep.subr.bf16.mxu0 0
    %917 = vmatpush1.bf16.xpose.msra.mxu0 0
    %918 = vmatprep.subr.bf16.mxu0 0
    %919 = vmatpush1.bf16.xpose.msra.mxu0 0
    %920 = vmatprep.subr.bf16.mxu0 0
    %921 = vmatpush1.bf16.xpose.msra.mxu0 0
    %922 = vmatprep.subr.bf16.mxu0 0
    %923 = vmatpush1.bf16.xpose.msra.mxu0 0
    %924 = vmatprep.subr.bf16.mxu0 0
    %925 = vmatpush1.bf16.xpose.msra.mxu0 0
    %926 = vmatprep.subr.bf16.mxu0 0
    %927 = vmatpush1.bf16.xpose.msra.mxu0 0
    %928 = vmatprep.subr.bf16.mxu0 0
    %929 = vmatpush1.bf16.xpose.msra.mxu0 0
    %930 = vmatprep.subr.bf16.mxu0 0
    %931 = vmatpush1.bf16.xpose.msra.mxu0 0
    %932 = vmatprep.subr.bf16.mxu0 0
    %933 = vmatpush1.bf16.xpose.msra.mxu0 0
    %934 = vmatprep.mubr.bf16.mxu0 0
    %935 = vmatmul.mubr.bf16.gmra.mrb[0].mxu0 %v897
    %v936 = vpop.f32.mrb[0].mxu0
    %v937 = vadd.f32 0.0, %v936
    %v938 = vpop.f32.mrb[0].mxu0
    %v939 = vpop.f32.mrb[0].mxu0
    %v940 = vpop.f32.mrb[0].mxu0
    %941 = vdwg.mxu0
    %v942 = vmul.f32 %v887, 0.35355338
    %v943 = vmul.f32 %v937, 0.35355338
    %v944 = vadd.f32 %v942, %v167
    %v945 = vadd.f32 %v943, %v167
    %v946 = vsel %vm173, %v944, -inf
    %947 = vmax.xlane.f32.xlu0 %v946
    %v948 = vpop.xlane.xlu0 %947
    %v949 = vsel %vm173, %v945, -inf
    %950 = vmax.xlane.f32.xlu0 %v949
    %v951 = vpop.xlane.xlu0 %950
    %v952 = vsub.f32 %v944, %v948
    %v953 = vsub.f32 %v945, %v951
    %v954 = vmul.f32 %v952, 1.442695
    %v955 = vpow.pop %v954
    %v956 = vmul.f32 %v953, 1.442695
    %v957 = vpow.pop %v956
    %v958 = vsel %vm173, %v955, 0.0
    %959 = vadd.xlane.f32.xlu0 %v958
    %v960 = vpop.xlane.xlu0 %959
    %v961 = vsel %vm173, %v957, 0.0
    %962 = vadd.xlane.f32.xlu0 %v961
    %v963 = vpop.xlane.xlu0 %962
    %v964 = vrcp.pop %v960
    %v965 = vrcp.pop %v963
    %v966 = vmul.f32 %v955, %v964
    %v967 = vmul.f32 %v957, %v965
    %v968 = vpack.c.bf16 %v966, %v966
    %v969 = vpack.c.bf16 %v967, %v967
    %970 = vrot.lane.b32.xlu0 %v168, 40
    %v971 = vpop.permute.xlu0 %970
    %v973 = vsel %vm173, %v968, 0
    %v976 = vsel %vm302, %v971, 0
    %978 = vmatprep.subr.bf16.mxu0 0
    %979 = vmatpush1.bf16.msra.mxu0 %v976
    %980 = vmatprep.subr.bf16.mxu0 0
    %981 = vmatpush1.bf16.msra.mxu0 0
    %982 = vmatprep.subr.bf16.mxu0 0
    %983 = vmatpush1.bf16.msra.mxu0 0
    %984 = vmatprep.subr.bf16.mxu0 0
    %985 = vmatpush1.bf16.msra.mxu0 0
    %986 = vmatprep.subr.bf16.mxu0 0
    %987 = vmatpush1.bf16.msra.mxu0 0
    %988 = vmatprep.subr.bf16.mxu0 0
    %989 = vmatpush1.bf16.msra.mxu0 0
    %990 = vmatprep.subr.bf16.mxu0 0
    %991 = vmatpush1.bf16.msra.mxu0 0
    %992 = vmatprep.subr.bf16.mxu0 0
    %993 = vmatpush1.bf16.msra.mxu0 0
    %994 = vmatprep.subr.bf16.mxu0 0
    %995 = vmatpush1.bf16.msra.mxu0 0
    %996 = vmatprep.subr.bf16.mxu0 0
    %997 = vmatpush1.bf16.msra.mxu0 0
    %998 = vmatprep.subr.bf16.mxu0 0
    %999 = vmatpush1.bf16.msra.mxu0 0
    %1000 = vmatprep.subr.bf16.mxu0 0
    %1001 = vmatpush1.bf16.msra.mxu0 0
    %1002 = vmatprep.subr.bf16.mxu0 0
    %1003 = vmatpush1.bf16.msra.mxu0 0
    %1004 = vmatprep.subr.bf16.mxu0 0
    %1005 = vmatpush1.bf16.msra.mxu0 0
    %1006 = vmatprep.subr.bf16.mxu0 0
    %1007 = vmatpush1.bf16.msra.mxu0 0
    %1008 = vmatprep.subr.bf16.mxu0 0
    %1009 = vmatpush1.bf16.msra.mxu0 0
    %1010 = vmatprep.mubr.bf16.mxu0 0
    %1011 = vmatmul.mubr.bf16.gmra.mrb[0].mxu0 %v973
    %v1012 = vpop.f32.mrb[0].mxu0
    %v1013 = vadd.f32 0.0, %v1012
    %v1014 = vpop.f32.mrb[0].mxu0
    %v1015 = vpop.f32.mrb[0].mxu0
    %v1016 = vpop.f32.mrb[0].mxu0
    %1017 = vdwg.mxu0
    %1018 = vrot.lane.b32.xlu0 %v169, 40
    %v1019 = vpop.permute.xlu0 %1018
    %v1021 = vsel %vm173, %v969, 0
    %v1024 = vsel %vm302, %v1019, 0
    %1026 = vmatprep.subr.bf16.mxu0 0
    %1027 = vmatpush1.bf16.msra.mxu0 %v1024
    %1028 = vmatprep.subr.bf16.mxu0 0
    %1029 = vmatpush1.bf16.msra.mxu0 0
    %1030 = vmatprep.subr.bf16.mxu0 0
    %1031 = vmatpush1.bf16.msra.mxu0 0
    %1032 = vmatprep.subr.bf16.mxu0 0
    %1033 = vmatpush1.bf16.msra.mxu0 0
    %1034 = vmatprep.subr.bf16.mxu0 0
    %1035 = vmatpush1.bf16.msra.mxu0 0
    %1036 = vmatprep.subr.bf16.mxu0 0
    %1037 = vmatpush1.bf16.msra.mxu0 0
    %1038 = vmatprep.subr.bf16.mxu0 0
    %1039 = vmatpush1.bf16.msra.mxu0 0
    %1040 = vmatprep.subr.bf16.mxu0 0
    %1041 = vmatpush1.bf16.msra.mxu0 0
    %1042 = vmatprep.subr.bf16.mxu0 0
    %1043 = vmatpush1.bf16.msra.mxu0 0
    %1044 = vmatprep.subr.bf16.mxu0 0
    %1045 = vmatpush1.bf16.msra.mxu0 0
    %1046 = vmatprep.subr.bf16.mxu0 0
    %1047 = vmatpush1.bf16.msra.mxu0 0
    %1048 = vmatprep.subr.bf16.mxu0 0
    %1049 = vmatpush1.bf16.msra.mxu0 0
    %1050 = vmatprep.subr.bf16.mxu0 0
    %1051 = vmatpush1.bf16.msra.mxu0 0
    %1052 = vmatprep.subr.bf16.mxu0 0
    %1053 = vmatpush1.bf16.msra.mxu0 0
    %1054 = vmatprep.subr.bf16.mxu0 0
    %1055 = vmatpush1.bf16.msra.mxu0 0
    %1056 = vmatprep.subr.bf16.mxu0 0
    %1057 = vmatpush1.bf16.msra.mxu0 0
    %1058 = vmatprep.mubr.bf16.mxu0 0
    %1059 = vmatmul.mubr.bf16.gmra.mrb[0].mxu0 %v1021
    %v1060 = vpop.f32.mrb[0].mxu0
    %v1061 = vadd.f32 0.0, %v1060
    %v1062 = vpop.f32.mrb[0].mxu0
    %v1063 = vpop.f32.mrb[0].mxu0
    %v1064 = vpop.f32.mrb[0].mxu0
    %1065 = vdwg.mxu0
    %1068 = vrot.lane.b32.xlu0 %v565, 8
    %v1069 = vpop.permute.xlu0 %1068
    %1070 = vrot.lane.b32.xlu0 %v613, 8
    %v1071 = vpop.permute.xlu0 %1070
    %1076 = vrot.lane.b32.xlu0 %v789, 16
    %v1077 = vpop.permute.xlu0 %1076
    %1078 = vrot.lane.b32.xlu0 %v837, 16
    %v1079 = vpop.permute.xlu0 %1078
    %1084 = vrot.lane.b32.xlu0 %v1013, 24
    %v1085 = vpop.permute.xlu0 %1084
    %1086 = vrot.lane.b32.xlu0 %v1061, 24
    %v1087 = vpop.permute.xlu0 %1086
    %v1090 = vsel %vm173, %v341, %v1069
    %v1091 = vsel %vm173, %v389, %v1071
    %vm1092 = vcmask 130048
    %v1093 = vsel %vm1092, %v1090, %v1077
    %v1094 = vsel %vm1092, %v1091, %v1079
    %vm1095 = vcmask 195584
    %v1096 = vsel %vm1095, %v1093, %v1085
    %v1097 = vsel %vm1095, %v1094, %v1087
    %v1098 = vpack.c.bf16 %v1097, %v1096
    %v1099 = vld [vmem:[%s5] sm:$0xf]
    %v1100 = vld [vmem:[%s5 + $0x4] sm:$0xf]
    %v1101 = vld [vmem:[%s5 + $0x8] sm:$0xf]
    %v1102 = vld [vmem:[%s5 + $0xc] sm:$0xf]
    %v1103 = vld [vmem:[%s6] sm:$0x1]
    %v1105 = vlaneseq
    %v1106 = vshrl.u32 %v1105, 7
    %v1107 = vsub.s32 0, %v1106
    %v1108 = vrot.slane %v1103, %v1107
    %v1114 = vunpack.c.l.b16 %v1099
    %v1115 = vunpack.c.l.b16 %v1100
    %v1116 = vunpack.c.l.b16 %v1101
    %v1117 = vunpack.c.l.b16 %v1102
    %v1118 = vpack.c.b16 %v1115, %v1114
    %v1119 = vpack.c.b16 %v1117, %v1116
    %v1123 = vsel %vm50, %v1098, 0
    %1125 = vmatprep.subr.bf16.mxu0 0
    %1126 = vmatpush1.bf16.msra.mxu0 %v1118
    %1127 = vmatprep.subr.bf16.mxu0 0
    %1128 = vmatpush1.bf16.msra.mxu0 %v1119
    %1129 = vmatprep.subr.bf16.mxu0 0
    %1130 = vmatpush1.bf16.msra.mxu0 0
    %1131 = vmatprep.subr.bf16.mxu0 0
    %1132 = vmatpush1.bf16.msra.mxu0 0
    %1133 = vmatprep.subr.bf16.mxu0 0
    %1134 = vmatpush1.bf16.msra.mxu0 0
    %1135 = vmatprep.subr.bf16.mxu0 0
    %1136 = vmatpush1.bf16.msra.mxu0 0
    %1137 = vmatprep.subr.bf16.mxu0 0
    %1138 = vmatpush1.bf16.msra.mxu0 0
    %1139 = vmatprep.subr.bf16.mxu0 0
    %1140 = vmatpush1.bf16.msra.mxu0 0
    %1141 = vmatprep.subr.bf16.mxu0 0
    %1142 = vmatpush1.bf16.msra.mxu0 0
    %1143 = vmatprep.subr.bf16.mxu0 0
    %1144 = vmatpush1.bf16.msra.mxu0 0
    %1145 = vmatprep.subr.bf16.mxu0 0
    %1146 = vmatpush1.bf16.msra.mxu0 0
    %1147 = vmatprep.subr.bf16.mxu0 0
    %1148 = vmatpush1.bf16.msra.mxu0 0
    %1149 = vmatprep.subr.bf16.mxu0 0
    %1150 = vmatpush1.bf16.msra.mxu0 0
    %1151 = vmatprep.subr.bf16.mxu0 0
    %1152 = vmatpush1.bf16.msra.mxu0 0
    %1153 = vmatprep.subr.bf16.mxu0 0
    %1154 = vmatpush1.bf16.msra.mxu0 0
    %1155 = vmatprep.subr.bf16.mxu0 0
    %1156 = vmatpush1.bf16.msra.mxu0 0
    %1157 = vmatprep.mubr.bf16.mxu0 0
    %1158 = vmatmul.mubr.bf16.gmra.mrb[0].mxu0 %v1123
    %v1159 = vpop.f32.mrb[0].mxu0
    %v1160 = vadd.f32 %v1108, %v1159
    %v1161 = vpop.f32.mrb[0].mxu0
    %v1162 = vpop.f32.mrb[0].mxu0
    %v1163 = vadd.f32 %v1108, %v1162
    %v1164 = vpop.f32.mrb[0].mxu0
    %1165 = vdwg.mxu0
    %v1166 = vadd.f32 %v46, %v1160
    %v1167 = vadd.f32 %v47, %v1163
    %v1168 = vld [vmem:[%s7] sm:$0x1]
    %v1169 = vld [vmem:[%s8] sm:$0x1]
    %v1170 = vsel %vm50, %v1166, 0.0
    %1171 = vadd.xlane.f32.xlu0 %v1170
    %v1172 = vpop.xlane.xlu0 %1171
    %v1173 = vsel %vm50, %v1167, 0.0
    %1174 = vadd.xlane.f32.xlu0 %v1173
    %v1175 = vpop.xlane.xlu0 %1174
    %v1176 = vmul.f32 %v1172, %v57
    %v1177 = vmul.f32 %v1175, %v57
    %v1178 = vsub.f32 %v1166, %v1176
    %v1179 = vsub.f32 %v1167, %v1177
    %v1180 = vmul.f32 %v1178, %v1178
    %v1181 = vmul.f32 %v1179, %v1179
    %v1182 = vsel %vm50, %v1180, 0.0
    %1183 = vadd.xlane.f32.xlu0 %v1182
    %v1184 = vpop.xlane.xlu0 %1183
    %v1185 = vsel %vm50, %v1181, 0.0
    %1186 = vadd.xlane.f32.xlu0 %v1185
    %v1187 = vpop.xlane.xlu0 %1186
    %v1188 = vmul.f32 %v1184, %v57
    %v1189 = vmul.f32 %v1187, %v57
    %v1190 = vadd.f32 %v1188, 1e-05
    %v1191 = vadd.f32 %v1189, 1e-05
    %v1192 = vrsqrt.pop %v1190
    %v1193 = vrsqrt.pop %v1191
    %v1194 = vmul.f32 %v1178, %v1192
    %v1195 = vmul.f32 %v1179, %v1193
    %v1197 = vlaneseq
    %v1198 = vshrl.u32 %v1197, 7
    %v1199 = vsub.s32 0, %v1198
    %v1200 = vrot.slane %v1168, %v1199
    %v1202 = vmul.f32 %v1194, %v1200
    %v1203 = vmul.f32 %v1195, %v1200
    %v1205 = vlaneseq
    %v1206 = vshrl.u32 %v1205, 7
    %v1207 = vsub.s32 0, %v1206
    %v1208 = vrot.slane %v1169, %v1207
    %v1210 = vadd.f32 %v1202, %v1208
    %v1211 = vadd.f32 %v1203, %v1208
    %v1212 = vpack.c.bf16 %v1211, %v1210
    %v1213 = vld [vmem:[%s9] sm:$0xf]
    %v1214 = vld [vmem:[%s9 + $0x4] sm:$0xf]
    %v1215 = vld [vmem:[%s9 + $0x8] sm:$0xf]
    %v1216 = vld [vmem:[%s9 + $0xc] sm:$0xf]
    %v1217 = vld [vmem:[%s10] sm:$0x1]
    %v1219 = vlaneseq
    %v1220 = vshrl.u32 %v1219, 7
    %v1221 = vsub.s32 0, %v1220
    %v1222 = vrot.slane %v1217, %v1221
    %v1228 = vunpack.c.l.b16 %v1213
    %v1229 = vunpack.c.l.b16 %v1214
    %v1230 = vunpack.c.l.b16 %v1215
    %v1231 = vunpack.c.l.b16 %v1216
    %v1232 = vpack.c.b16 %v1229, %v1228
    %v1233 = vpack.c.b16 %v1231, %v1230
    %v1237 = vsel %vm50, %v1212, 0
    %1239 = vmatprep.subr.bf16.mxu0 0
    %1240 = vmatpush1.bf16.msra.mxu0 %v1232
    %1241 = vmatprep.subr.bf16.mxu0 0
    %1242 = vmatpush1.bf16.msra.mxu0 %v1233
    %1243 = vmatprep.subr.bf16.mxu0 0
    %1244 = vmatpush1.bf16.msra.mxu0 0
    %1245 = vmatprep.subr.bf16.mxu0 0
    %1246 = vmatpush1.bf16.msra.mxu0 0
    %1247 = vmatprep.subr.bf16.mxu0 0
    %1248 = vmatpush1.bf16.msra.mxu0 0
    %1249 = vmatprep.subr.bf16.mxu0 0
    %1250 = vmatpush1.bf16.msra.mxu0 0
    %1251 = vmatprep.subr.bf16.mxu0 0
    %1252 = vmatpush1.bf16.msra.mxu0 0
    %1253 = vmatprep.subr.bf16.mxu0 0
    %1254 = vmatpush1.bf16.msra.mxu0 0
    %1255 = vmatprep.subr.bf16.mxu0 0
    %1256 = vmatpush1.bf16.msra.mxu0 0
    %1257 = vmatprep.subr.bf16.mxu0 0
    %1258 = vmatpush1.bf16.msra.mxu0 0
    %1259 = vmatprep.subr.bf16.mxu0 0
    %1260 = vmatpush1.bf16.msra.mxu0 0
    %1261 = vmatprep.subr.bf16.mxu0 0
    %1262 = vmatpush1.bf16.msra.mxu0 0
    %1263 = vmatprep.subr.bf16.mxu0 0
    %1264 = vmatpush1.bf16.msra.mxu0 0
    %1265 = vmatprep.subr.bf16.mxu0 0
    %1266 = vmatpush1.bf16.msra.mxu0 0
    %1267 = vmatprep.subr.bf16.mxu0 0
    %1268 = vmatpush1.bf16.msra.mxu0 0
    %1269 = vmatprep.subr.bf16.mxu0 0
    %1270 = vmatpush1.bf16.msra.mxu0 0
    %1271 = vmatprep.mubr.bf16.mxu0 0
    %1272 = vmatmul.mubr.bf16.gmra.mrb[0].mxu0 %v1237
    %v1273 = vpop.f32.mrb[0].mxu0
    %v1274 = vadd.f32 %v1222, %v1273
    %v1275 = vpop.f32.mrb[0].mxu0
    %v1276 = vpop.f32.mrb[0].mxu0
    %v1277 = vadd.f32 %v1222, %v1276
    %v1278 = vpop.f32.mrb[0].mxu0
    %1279 = vdwg.mxu0
    %v1280 = vmul.f32 %v1274, 0.5
    %v1281 = vmul.f32 %v1277, 0.5
    %v1282 = vmul.f32 %v1274, 0.70710677
    %v1283 = vmul.f32 %v1277, 0.70710677
    %v1284 = verf.f32.pop %v1282
    %v1285 = verf.f32.pop %v1283
    %v1286 = vadd.f32 %v1284, 1.0
    %v1287 = vadd.f32 %v1285, 1.0
    %v1288 = vmul.f32 %v1280, %v1286
    %v1289 = vmul.f32 %v1281, %v1287
    %v1290 = vpack.c.bf16 %v1289, %v1288
    %v1291 = vld [vmem:[%s11] sm:$0xf]
    %v1292 = vld [vmem:[%s11 + $0x4] sm:$0xf]
    %v1293 = vld [vmem:[%s11 + $0x8] sm:$0xf]
    %v1294 = vld [vmem:[%s11 + $0xc] sm:$0xf]
    %v1295 = vld [vmem:[%s11 + $0x10] sm:$0xf]
    %v1296 = vld [vmem:[%s11 + $0x14] sm:$0xf]
    %v1297 = vld [vmem:[%s11 + $0x18] sm:$0xf]
    %v1298 = vld [vmem:[%s11 + $0x1c] sm:$0xf]
    %v1299 = vld [vmem:[%s11 + $0x20] sm:$0xf]
    %v1300 = vld [vmem:[%s11 + $0x24] sm:$0xf]
    %v1301 = vld [vmem:[%s11 + $0x28] sm:$0xf]
    %v1302 = vld [vmem:[%s11 + $0x2c] sm:$0xf]
    %v1303 = vld [vmem:[%s11 + $0x30] sm:$0xf]
    %v1304 = vld [vmem:[%s11 + $0x34] sm:$0xf]
    %v1305 = vld [vmem:[%s11 + $0x38] sm:$0xf]
    %v1306 = vld [vmem:[%s11 + $0x3c] sm:$0xf]
    %v1323 = vunpack.c.l.b16 %v1291
    %v1324 = vunpack.c.l.b16 %v1292
    %v1325 = vunpack.c.l.b16 %v1293
    %v1326 = vunpack.c.l.b16 %v1294
    %v1327 = vunpack.c.l.b16 %v1295
    %v1328 = vunpack.c.l.b16 %v1296
    %v1329 = vunpack.c.l.b16 %v1297
    %v1330 = vunpack.c.l.b16 %v1298
    %v1331 = vunpack.c.l.b16 %v1299
    %v1332 = vunpack.c.l.b16 %v1300
    %v1333 = vunpack.c.l.b16 %v1301
    %v1334 = vunpack.c.l.b16 %v1302
    %v1335 = vunpack.c.l.b16 %v1303
    %v1336 = vunpack.c.l.b16 %v1304
    %v1337 = vunpack.c.l.b16 %v1305
    %v1338 = vunpack.c.l.b16 %v1306
    %v1339 = vpack.c.b16 %v1324, %v1323
    %v1340 = vpack.c.b16 %v1326, %v1325
    %v1341 = vpack.c.b16 %v1328, %v1327
    %v1342 = vpack.c.b16 %v1330, %v1329
    %v1343 = vpack.c.b16 %v1332, %v1331
    %v1344 = vpack.c.b16 %v1334, %v1333
    %v1345 = vpack.c.b16 %v1336, %v1335
    %v1346 = vpack.c.b16 %v1338, %v1337
    %1355 = vmatprep.subr.bf16.mxu0 0
    %1356 = vmatpush1.bf16.msra.mxu0 %v1339
    %1357 = vmatprep.subr.bf16.mxu0 0
    %1358 = vmatpush1.bf16.msra.mxu0 %v1340
    %1359 = vmatprep.subr.bf16.mxu0 0
    %1360 = vmatpush1.bf16.msra.mxu0 %v1341
    %1361 = vmatprep.subr.bf16.mxu0 0
    %1362 = vmatpush1.bf16.msra.mxu0 %v1342
    %1363 = vmatprep.subr.bf16.mxu0 0
    %1364 = vmatpush1.bf16.msra.mxu0 %v1343
    %1365 = vmatprep.subr.bf16.mxu0 0
    %1366 = vmatpush1.bf16.msra.mxu0 %v1344
    %1367 = vmatprep.subr.bf16.mxu0 0
    %1368 = vmatpush1.bf16.msra.mxu0 %v1345
    %1369 = vmatprep.subr.bf16.mxu0 0
    %1370 = vmatpush1.bf16.msra.mxu0 %v1346
    %1371 = vmatprep.subr.bf16.mxu0 0
    %1372 = vmatpush1.bf16.msra.mxu0 0
    %1373 = vmatprep.subr.bf16.mxu0 0
    %1374 = vmatpush1.bf16.msra.mxu0 0
    %1375 = vmatprep.subr.bf16.mxu0 0
    %1376 = vmatpush1.bf16.msra.mxu0 0
    %1377 = vmatprep.subr.bf16.mxu0 0
    %1378 = vmatpush1.bf16.msra.mxu0 0
    %1379 = vmatprep.subr.bf16.mxu0 0
    %1380 = vmatpush1.bf16.msra.mxu0 0
    %1381 = vmatprep.subr.bf16.mxu0 0
    %1382 = vmatpush1.bf16.msra.mxu0 0
    %1383 = vmatprep.subr.bf16.mxu0 0
    %1384 = vmatpush1.bf16.msra.mxu0 0
    %1385 = vmatprep.subr.bf16.mxu0 0
    %1386 = vmatpush1.bf16.msra.mxu0 0
    %1387 = vmatprep.mubr.bf16.mxu0 0
    %1388 = vmatmul.mubr.bf16.gmra.mrb[0].mxu0 %v1290
    %v1389 = vpop.f32.mrb[0].mxu0
    %v1390 = vadd.f32 0.0, %v1389
    %v1391 = vpop.f32.mrb[0].mxu0
    %v1392 = vpop.f32.mrb[0].mxu0
    %v1393 = vadd.f32 0.0, %v1392
    %v1394 = vpop.f32.mrb[0].mxu0
    %1395 = vdwg.mxu0
    %v1396 = vadd.f32 %v1166, %v1390
    %v1397 = vadd.f32 %v1167, %v1393
    %v1398 = vld [vmem:[%s12] sm:$0x1]
    %v1400 = vlaneseq
    %v1401 = vshrl.u32 %v1400, 7
    %v1402 = vsub.s32 0, %v1401
    %v1403 = vrot.slane %v1398, %v1402
    %v1405 = vadd.f32 %v1396, %v1403
    %v1406 = vadd.f32 %v1397, %v1403
    %1407 = vst.msk [vmem:[#allocation2] sm:$0xff] %vm50, %v1405
    %1408 = vst.msk [vmem:[#allocation2 + $0x8] sm:$0xff] %vm50, %v1406
    // Predicated region
    $region54: #{tpu_custom_call.1} parent=1 // pred_check
      _
    $region55: #{tpu_custom_call.1} parent=1 // pred_check_branch
      %1410 = sbr.rel (0) target = $region57
    $region56: #{tpu_custom_call.1} parent=1 // pred_region
      %s1412 = ssub.s32 256, 256
      %1413 = vsyncadd [#allocation3], %s1412
      %s1414 = sshll.u32 [#allocation2], 4
      %s1415 = int_to_ptr.vmem [resolvable:$true] %s1414
      %1420 = dma.vmem_to_hbm [thread:$0]  %s1415, 256, %s13, [#allocation3], 128, 128, 8
    $region57: #{tpu_custom_call.1} parent=1 // pred_fallthru
      _
    // Predicated region
    $region58: #{tpu_custom_call.1} parent=1 // pred_check
      _
    $region59: #{tpu_custom_call.1} parent=1 // pred_check_branch
      %1422 = sbr.rel (0) target = $region61
    $region60: #{tpu_custom_call.1} parent=1 // pred_region
      %1423 = dma.done [#allocation3], 256
    $region61: #{tpu_custom_call.1} parent=1 // pred_fallthru
      _
    %1424 = vsyncpa [#allocation3], 1

</llo_original>
